<compile_context>
chip_gen: v7x
topology: tpu7x:2x2x1
jax: 0.10.0
libtpu: 0.0.40
codegen_flags: <defaults>
</compile_context>

<pallas_src>
import functools

import jax
import jax.numpy as jnp
from jax import lax
from jax.experimental import pallas as pl
from jax.experimental.pallas import tpu as pltpu

EPS = 1e-5

# ----------------------------- model config (small, deterministic) -----------------------------
B = 2            # batch
S = 8            # num_tokens (seq)
EMB = 32         # emb_dim
N_HEADS = 4
N_KV_GROUPS = 2
HEAD_DIM = EMB // N_HEADS          # 8
GROUP_SIZE = N_HEADS // N_KV_GROUPS
HIDDEN = 64      # hidden_dim
CTX_LEN = 16     # context length for rope tables
DTYPE = jnp.float32


# ----------------------------- fused TransformerBlock kernel -----------------------------
def _block_kernel(x_ref, wqkv_ref, wo_ref, wfc12_ref, wfc3_ref,
                  n1_ref, n2_ref, cos_ref, sin_ref, o_ref,
                  *, n_heads, n_kv_groups, head_dim, hidden):
    group_size = n_heads // n_kv_groups
    seq = x_ref.shape[1]

    x = x_ref[0].astype(jnp.float32)                      # (S, E)

    # ---------- RMSNorm 1 (f32 statistics) ----------
    ms = jnp.mean(x * x, axis=-1, keepdims=True)
    h = x * lax.rsqrt(ms + EPS) * n1_ref[...]

    # ---------- fused QKV projection: one wide MXU pass ----------
    qkv = jnp.dot(h, wqkv_ref[...], preferred_element_type=jnp.float32)   # (S, (H+2*KV)*Dh)
    q_all = qkv[:, : n_heads * head_dim]
    k_all = qkv[:, n_heads * head_dim: (n_heads + n_kv_groups) * head_dim]
    v_all = qkv[:, (n_heads + n_kv_groups) * head_dim:]

    cos = cos_ref[...]                                    # (S, Dh)
    sin = sin_ref[...]
    half = head_dim // 2

    def rope(t):                                          # t: (S, Dh)
        t1 = t[:, :half]
        t2 = t[:, half:]
        rot = jnp.concatenate([-t2, t1], axis=-1)
        return t * cos + rot * sin

    # causal bias built in-kernel (no (S, S) mask input DMA; no -inf / exp NaN risk)
    row = lax.broadcasted_iota(jnp.int32, (seq, seq), 0)
    col = lax.broadcasted_iota(jnp.int32, (seq, seq), 1)
    bias = jnp.where(col > row, jnp.float32(-1e30), jnp.float32(0.0))

    inv_sqrt_d = jnp.float32(1.0 / (head_dim ** 0.5))

    # GQA: RoPE/keep exactly one copy per KV group (no repeat_interleave materialization)
    k_rot, v_grp = [], []
    for g in range(n_kv_groups):
        kg = k_all[:, g * head_dim:(g + 1) * head_dim]
        k_rot.append(rope(kg))
        v_grp.append(v_all[:, g * head_dim:(g + 1) * head_dim])

    # per-head attention (static unrolled loop), scale folded into q
    ctx_cols = []
    for hh in range(n_heads):
        g = hh // group_size
        qh = rope(q_all[:, hh * head_dim:(hh + 1) * head_dim]) * inv_sqrt_d
        scores = lax.dot_general(qh, k_rot[g], (((1,), (1,)), ((), ())),
                                 preferred_element_type=jnp.float32) + bias   # (S, S)
        m = jnp.max(scores, axis=-1, keepdims=True)
        e = jnp.exp(scores - m)
        l = jnp.sum(e, axis=-1, keepdims=True)
        p = e * pl.reciprocal(l, approx=True)             # EUP reciprocal
        ctx_cols.append(jnp.dot(p, v_grp[g], preferred_element_type=jnp.float32))
    ctx = jnp.concatenate(ctx_cols, axis=-1)              # (S, E) lane-dense slab

    attn_out = jnp.dot(ctx, wo_ref[...], preferred_element_type=jnp.float32)
    x1 = x + attn_out                                     # residual 1

    # ---------- RMSNorm 2 + SwiGLU FF (fused fc1||fc2) ----------
    ms2 = jnp.mean(x1 * x1, axis=-1, keepdims=True)
    h2 = x1 * lax.rsqrt(ms2 + EPS) * n2_ref[...]
    h12 = jnp.dot(h2, wfc12_ref[...], preferred_element_type=jnp.float32)    # (S, 2*HIDDEN)
    h_gate = h12[:, :hidden]
    h_lin = h12[:, hidden:]
    act = (h_gate * jax.nn.sigmoid(h_gate)) * h_lin       # SwiGLU
    ff = jnp.dot(act, wfc3_ref[...], preferred_element_type=jnp.float32)

    o_ref[0] = (x1 + ff).astype(o_ref.dtype)              # residual 2


def transformer_block_forward(x, cos, sin, params):
    """x: (B, S, E); cos/sin: (CTX, Dh). Causal mask is generated inside the kernel."""
    Bx, Sx, E = x.shape
    Dh = HEAD_DIM
    qkv_out = (N_HEADS + 2 * N_KV_GROUPS) * Dh

    # fuse projection weights once (wider MXU passes, fewer weight pushes)
    w_qkv = jnp.concatenate([params["w_q"], params["w_k"], params["w_v"]], axis=1)   # (E, qkv_out)
    w_fc12 = jnp.concatenate([params["w_fc1"], params["w_fc2"]], axis=1)             # (E, 2*HIDDEN)
    n1 = params["norm1_w"].reshape(1, E)
    n2 = params["norm2_w"].reshape(1, E)
    cos_s = cos[:Sx]
    sin_s = sin[:Sx]

    kernel = functools.partial(
        _block_kernel,
        n_heads=N_HEADS, n_kv_groups=N_KV_GROUPS, head_dim=Dh, hidden=HIDDEN)

    return pl.pallas_call(
        kernel,
        out_shape=jax.ShapeDtypeStruct((Bx, Sx, E), x.dtype),
        grid=(Bx,),
        in_specs=[
            pl.BlockSpec((1, Sx, E), lambda b: (b, 0, 0)),        # x (per batch row)
            pl.BlockSpec((E, qkv_out), lambda b: (0, 0)),         # fused W_qkv
            pl.BlockSpec((E, E), lambda b: (0, 0)),               # W_o
            pl.BlockSpec((E, 2 * HIDDEN), lambda b: (0, 0)),      # fused W_fc1||fc2
            pl.BlockSpec((HIDDEN, E), lambda b: (0, 0)),          # W_fc3
            pl.BlockSpec((1, E), lambda b: (0, 0)),               # norm1 weight
            pl.BlockSpec((1, E), lambda b: (0, 0)),               # norm2 weight
            pl.BlockSpec((Sx, Dh), lambda b: (0, 0)),             # cos
            pl.BlockSpec((Sx, Dh), lambda b: (0, 0)),             # sin
        ],
        out_specs=pl.BlockSpec((1, Sx, E), lambda b: (b, 0, 0)),
        compiler_params=pltpu.CompilerParams(
            dimension_semantics=("parallel",)),                   # batch tiles shard across TCs (v7x)
    )(x, w_qkv, params["w_o"], w_fc12, params["w_fc3"], n1, n2, cos_s, sin_s)


# ----------------------------- pure-JAX reference (for correctness check) -----------------------------
def ref_forward(x, mask_b, cos, sin, params):
    def rms(t, w):
        ms = jnp.mean(t * t, axis=-1, keepdims=True)
        return t * lax.rsqrt(ms + EPS) * w

    def rope(t):  # (B, H, S, D)
        d = t.shape[-1]
        half = d // 2
        t1, t2 = t[..., :half], t[..., half:]
        rot = jnp.concatenate([-t2, t1], axis=-1)
        return t * cos[None, None, :t.shape[2]] + rot * sin[None, None, :t.shape[2]]

    Bx, Sx, E = x.shape
    h = rms(x, params["norm1_w"])
    q = (h @ params["w_q"]).reshape(Bx, Sx, N_HEADS, HEAD_DIM).transpose(0, 2, 1, 3)
    k = (h @ params["w_k"]).reshape(Bx, Sx, N_KV_GROUPS, HEAD_DIM).transpose(0, 2, 1, 3)
    v = (h @ params["w_v"]).reshape(Bx, Sx, N_KV_GROUPS, HEAD_DIM).transpose(0, 2, 1, 3)
    q, k = rope(q), rope(k)
    k = jnp.repeat(k, GROUP_SIZE, axis=1)
    v = jnp.repeat(v, GROUP_SIZE, axis=1)
    scores = jnp.einsum("bhqd,bhkd->bhqk", q, k)
    scores = jnp.where(mask_b[None, None, :Sx, :Sx], -jnp.inf, scores)
    w = jax.nn.softmax(scores / jnp.sqrt(jnp.float32(HEAD_DIM)), axis=-1)
    ctx = jnp.einsum("bhqk,bhkd->bhqd", w, v).transpose(0, 2, 1, 3).reshape(Bx, Sx, E)
    x1 = x + ctx @ params["w_o"]
    h2 = rms(x1, params["norm2_w"])
    h1 = h2 @ params["w_fc1"]
    ff = (jax.nn.silu(h1) * (h2 @ params["w_fc2"])) @ params["w_fc3"]
    return x1 + ff


# ----------------------------- main -----------------------------
if __name__ == "__main__":
    key = jax.random.PRNGKey(0)
    keys = jax.random.split(key, 9)

    scale = 0.05
    params = {
        "w_q": scale * jax.random.normal(keys[0], (EMB, EMB), DTYPE),
        "w_k": scale * jax.random.normal(keys[1], (EMB, N_KV_GROUPS * HEAD_DIM), DTYPE),
        "w_v": scale * jax.random.normal(keys[2], (EMB, N_KV_GROUPS * HEAD_DIM), DTYPE),
        "w_o": scale * jax.random.normal(keys[3], (EMB, EMB), DTYPE),
        "w_fc1": scale * jax.random.normal(keys[4], (EMB, HIDDEN), DTYPE),
        "w_fc2": scale * jax.random.normal(keys[5], (EMB, HIDDEN), DTYPE),
        "w_fc3": scale * jax.random.normal(keys[6], (HIDDEN, EMB), DTYPE),
        "norm1_w": jnp.ones((EMB,), DTYPE),   # nn.RMSNorm default init
        "norm2_w": jnp.ones((EMB,), DTYPE),
    }

    x = jax.random.normal(keys[7], (B, S, EMB), DTYPE)

    # RoPE tables (context_length x head_dim)
    inv_freq = 1.0 / (10000.0 ** (jnp.arange(0, HEAD_DIM, 2, dtype=jnp.float32) / HEAD_DIM))
    pos = jnp.arange(CTX_LEN, dtype=jnp.float32)
    angles = pos[:, None] * inv_freq[None, :]
    angles = jnp.concatenate([angles, angles], axis=-1)
    cos = jnp.cos(angles).astype(DTYPE)
    sin = jnp.sin(angles).astype(DTYPE)

    # causal mask (only used by the reference; the Pallas kernel builds it from iota)
    mask_b = jnp.triu(jnp.ones((S, S), dtype=bool), k=1)

    out = transformer_block_forward(x, cos, sin, params)
    out = jax.block_until_ready(out)

    ref = ref_forward(x, mask_b, cos, sin, params)
    assert out.shape == (B, S, EMB)
    # tolerance 1e-3 to allow the EUP approx reciprocal in the softmax denominator
    assert jnp.allclose(out, ref, atol=1e-3, rtol=1e-3), "mismatch vs reference"

    print("KERNEL_OK")
</pallas_src>

<mosaic_0001>
module attributes {stable_mosaic.version = 11 : i64} {
  func.func @_block_kernel(%arg0: i32, %arg1: memref<1x8x32xf32, #tpu.memory_space<vmem>>, %arg2: memref<32x64xf32, #tpu.memory_space<vmem>>, %arg3: memref<32x32xf32, #tpu.memory_space<vmem>>, %arg4: memref<32x128xf32, #tpu.memory_space<vmem>>, %arg5: memref<64x32xf32, #tpu.memory_space<vmem>>, %arg6: memref<1x32xf32, #tpu.memory_space<vmem>>, %arg7: memref<1x32xf32, #tpu.memory_space<vmem>>, %arg8: memref<8x8xf32, #tpu.memory_space<vmem>>, %arg9: memref<8x8xf32, #tpu.memory_space<vmem>>, %arg10: memref<1x8x32xf32, #tpu.memory_space<vmem>>) attributes {dimension_semantics = [#tpu.dimension_semantics<parallel>], iteration_bounds = array<i64: 2>, scalar_prefetch = 0 : i64, scratch_operands = 0 : i64, tpu.core_type = #tpu.core_type<tc>, window_params = [{transform_indices = @transform_0, window_bounds = array<i64: 1, 8, 32>}, {pipeline_mode = #tpu.pipeline_mode<synchronous>, transform_indices = @transform_1, window_bounds = array<i64: 32, 64>}, {pipeline_mode = #tpu.pipeline_mode<synchronous>, transform_indices = @transform_2, window_bounds = array<i64: 32, 32>}, {pipeline_mode = #tpu.pipeline_mode<synchronous>, transform_indices = @transform_3, window_bounds = array<i64: 32, 128>}, {pipeline_mode = #tpu.pipeline_mode<synchronous>, transform_indices = @transform_4, window_bounds = array<i64: 64, 32>}, {pipeline_mode = #tpu.pipeline_mode<synchronous>, transform_indices = @transform_5, window_bounds = array<i64: 1, 32>}, {pipeline_mode = #tpu.pipeline_mode<synchronous>, transform_indices = @transform_6, window_bounds = array<i64: 1, 32>}, {pipeline_mode = #tpu.pipeline_mode<synchronous>, transform_indices = @transform_7, window_bounds = array<i64: 8, 8>}, {pipeline_mode = #tpu.pipeline_mode<synchronous>, transform_indices = @transform_8, window_bounds = array<i64: 8, 8>}, {transform_indices = @transform_9, window_bounds = array<i64: 1, 8, 32>}]} {
    %c0 = arith.constant 0 : index
    %c0_0 = arith.constant 0 : index
    %c0_1 = arith.constant 0 : index
    %0 = vector.load %arg1[%c0, %c0_0, %c0_1] : memref<1x8x32xf32, #tpu.memory_space<vmem>>, vector<1x8x32xf32>
    %1 = vector.shape_cast %0 : vector<1x8x32xf32> to vector<8x32xf32>
    %2 = arith.mulf %1, %1 : vector<8x32xf32>
    %cst = arith.constant dense<0.000000e+00> : vector<8xf32>
    %3 = vector.multi_reduction <add>, %2, %cst [1] : vector<8x32xf32> to vector<8xf32>
    %4 = vector.shape_cast %3 : vector<8xf32> to vector<8x1xf32>
    %cst_2 = arith.constant 3.200000e+01 : f32
    %5 = vector.broadcast %cst_2 : f32 to vector<8x1xf32>
    %6 = arith.divf %4, %5 : vector<8x1xf32>
    %cst_3 = arith.constant 9.99999974E-6 : f32
    %7 = vector.broadcast %cst_3 : f32 to vector<8x1xf32>
    %8 = arith.addf %6, %7 : vector<8x1xf32>
    %9 = math.rsqrt %8 : vector<8x1xf32>
    %10 = vector.broadcast %9 : vector<8x1xf32> to vector<8x32xf32>
    %11 = arith.mulf %1, %10 : vector<8x32xf32>
    %c0_4 = arith.constant 0 : index
    %c0_5 = arith.constant 0 : index
    %12 = vector.load %arg6[%c0_4, %c0_5] : memref<1x32xf32, #tpu.memory_space<vmem>>, vector<1x32xf32>
    %13 = vector.broadcast %12 : vector<1x32xf32> to vector<8x32xf32>
    %14 = arith.mulf %11, %13 : vector<8x32xf32>
    %c0_6 = arith.constant 0 : index
    %c0_7 = arith.constant 0 : index
    %15 = vector.load %arg2[%c0_6, %c0_7] : memref<32x64xf32, #tpu.memory_space<vmem>>, vector<32x64xf32>
    %cst_8 = arith.constant dense<0.000000e+00> : vector<8x64xf32>
    %16 = tpu.matmul %14, %15, %cst_8 {dimension_numbers = #tpu.dot_dimension_numbers<[1], [0], [0], [1], [0, 0, 1, 1], [], []>} : vector<8x32xf32>, vector<32x64xf32>, vector<8x64xf32> -> vector<8x64xf32>
    %17 = vector.extract_strided_slice %16 {offsets = [0, 0], sizes = [8, 32], strides = [1, 1]} : vector<8x64xf32> to vector<8x32xf32>
    %18 = vector.extract_strided_slice %16 {offsets = [0, 32], sizes = [8, 16], strides = [1, 1]} : vector<8x64xf32> to vector<8x16xf32>
    %19 = vector.extract_strided_slice %16 {offsets = [0, 48], sizes = [8, 16], strides = [1, 1]} : vector<8x64xf32> to vector<8x16xf32>
    %c0_9 = arith.constant 0 : index
    %c0_10 = arith.constant 0 : index
    %20 = vector.load %arg8[%c0_9, %c0_10] : memref<8x8xf32, #tpu.memory_space<vmem>>, vector<8x8xf32>
    %c0_11 = arith.constant 0 : index
    %c0_12 = arith.constant 0 : index
    %21 = vector.load %arg9[%c0_11, %c0_12] : memref<8x8xf32, #tpu.memory_space<vmem>>, vector<8x8xf32>
    %22 = tpu.iota {dimensions = array<i32: 0>} : vector<8x8xi32>
    %23 = tpu.iota {dimensions = array<i32: 1>} : vector<8x8xi32>
    %24 = arith.cmpi sgt, %23, %22 : vector<8x8xi32>
    %cst_13 = arith.constant -1.000000e+30 : f32
    %cst_14 = arith.constant 0.000000e+00 : f32
    %25 = vector.broadcast %cst_13 : f32 to vector<8x8xf32>
    %26 = vector.broadcast %cst_14 : f32 to vector<8x8xf32>
    %27 = arith.select %24, %25, %26 : vector<8x8xi1>, vector<8x8xf32>
    %28 = vector.extract_strided_slice %18 {offsets = [0, 0], sizes = [8, 8], strides = [1, 1]} : vector<8x16xf32> to vector<8x8xf32>
    %29 = vector.extract_strided_slice %28 {offsets = [0, 0], sizes = [8, 4], strides = [1, 1]} : vector<8x8xf32> to vector<8x4xf32>
    %30 = vector.extract_strided_slice %28 {offsets = [0, 4], sizes = [8, 4], strides = [1, 1]} : vector<8x8xf32> to vector<8x4xf32>
    %cst_15 = arith.constant 0.000000e+00 : f32
    %31 = vector.broadcast %cst_15 : f32 to vector<8x4xf32>
    %32 = arith.subf %31, %30 : vector<8x4xf32>
    %33 = tpu.concatenate %32, %29 in 1 : vector<8x4xf32>, vector<8x4xf32> -> vector<8x8xf32>
    %34 = arith.mulf %28, %20 : vector<8x8xf32>
    %35 = arith.mulf %33, %21 : vector<8x8xf32>
    %36 = arith.addf %34, %35 : vector<8x8xf32>
    %37 = vector.extract_strided_slice %19 {offsets = [0, 0], sizes = [8, 8], strides = [1, 1]} : vector<8x16xf32> to vector<8x8xf32>
    %38 = vector.extract_strided_slice %18 {offsets = [0, 8], sizes = [8, 8], strides = [1, 1]} : vector<8x16xf32> to vector<8x8xf32>
    %39 = vector.extract_strided_slice %38 {offsets = [0, 0], sizes = [8, 4], strides = [1, 1]} : vector<8x8xf32> to vector<8x4xf32>
    %40 = vector.extract_strided_slice %38 {offsets = [0, 4], sizes = [8, 4], strides = [1, 1]} : vector<8x8xf32> to vector<8x4xf32>
    %cst_16 = arith.constant 0.000000e+00 : f32
    %41 = vector.broadcast %cst_16 : f32 to vector<8x4xf32>
    %42 = arith.subf %41, %40 : vector<8x4xf32>
    %43 = tpu.concatenate %42, %39 in 1 : vector<8x4xf32>, vector<8x4xf32> -> vector<8x8xf32>
    %44 = arith.mulf %38, %20 : vector<8x8xf32>
    %45 = arith.mulf %43, %21 : vector<8x8xf32>
    %46 = arith.addf %44, %45 : vector<8x8xf32>
    %47 = vector.extract_strided_slice %19 {offsets = [0, 8], sizes = [8, 8], strides = [1, 1]} : vector<8x16xf32> to vector<8x8xf32>
    %48 = vector.extract_strided_slice %17 {offsets = [0, 0], sizes = [8, 8], strides = [1, 1]} : vector<8x32xf32> to vector<8x8xf32>
    %49 = vector.extract_strided_slice %48 {offsets = [0, 0], sizes = [8, 4], strides = [1, 1]} : vector<8x8xf32> to vector<8x4xf32>
    %50 = vector.extract_strided_slice %48 {offsets = [0, 4], sizes = [8, 4], strides = [1, 1]} : vector<8x8xf32> to vector<8x4xf32>
    %cst_17 = arith.constant 0.000000e+00 : f32
    %51 = vector.broadcast %cst_17 : f32 to vector<8x4xf32>
    %52 = arith.subf %51, %50 : vector<8x4xf32>
    %53 = tpu.concatenate %52, %49 in 1 : vector<8x4xf32>, vector<8x4xf32> -> vector<8x8xf32>
    %54 = arith.mulf %48, %20 : vector<8x8xf32>
    %55 = arith.mulf %53, %21 : vector<8x8xf32>
    %56 = arith.addf %54, %55 : vector<8x8xf32>
    %cst_18 = arith.constant 0.353553385 : f32
    %57 = vector.broadcast %cst_18 : f32 to vector<8x8xf32>
    %58 = arith.mulf %56, %57 : vector<8x8xf32>
    %cst_19 = arith.constant dense<0.000000e+00> : vector<8x8xf32>
    %59 = tpu.matmul %58, %36, %cst_19 {dimension_numbers = #tpu.dot_dimension_numbers<[1], [1], [0], [0], [0, 0, 1, 0], [], []>} : vector<8x8xf32>, vector<8x8xf32>, vector<8x8xf32> -> vector<8x8xf32>
    %60 = arith.addf %59, %27 : vector<8x8xf32>
    %cst_20 = arith.constant dense<0xFF800000> : vector<8xf32>
    %61 = vector.multi_reduction <maximumf>, %60, %cst_20 [1] : vector<8x8xf32> to vector<8xf32>
    %62 = vector.shape_cast %61 : vector<8xf32> to vector<8x1xf32>
    %63 = vector.broadcast %62 : vector<8x1xf32> to vector<8x8xf32>
    %64 = arith.subf %60, %63 : vector<8x8xf32>
    %65 = math.exp %64 : vector<8x8xf32>
    %cst_21 = arith.constant dense<0.000000e+00> : vector<8xf32>
    %66 = vector.multi_reduction <add>, %65, %cst_21 [1] : vector<8x8xf32> to vector<8xf32>
    %67 = vector.shape_cast %66 : vector<8xf32> to vector<8x1xf32>
    %68 = tpu.reciprocal %67 {approx = true} : vector<8x1xf32> -> vector<8x1xf32>
    %69 = vector.broadcast %68 : vector<8x1xf32> to vector<8x8xf32>
    %70 = arith.mulf %65, %69 : vector<8x8xf32>
    %cst_22 = arith.constant dense<0.000000e+00> : vector<8x8xf32>
    %71 = tpu.matmul %70, %37, %cst_22 {dimension_numbers = #tpu.dot_dimension_numbers<[1], [0], [0], [1], [0, 0, 1, 1], [], []>} : vector<8x8xf32>, vector<8x8xf32>, vector<8x8xf32> -> vector<8x8xf32>
    %72 = vector.extract_strided_slice %17 {offsets = [0, 8], sizes = [8, 8], strides = [1, 1]} : vector<8x32xf32> to vector<8x8xf32>
    %73 = vector.extract_strided_slice %72 {offsets = [0, 0], sizes = [8, 4], strides = [1, 1]} : vector<8x8xf32> to vector<8x4xf32>
    %74 = vector.extract_strided_slice %72 {offsets = [0, 4], sizes = [8, 4], strides = [1, 1]} : vector<8x8xf32> to vector<8x4xf32>
    %cst_23 = arith.constant 0.000000e+00 : f32
    %75 = vector.broadcast %cst_23 : f32 to vector<8x4xf32>
    %76 = arith.subf %75, %74 : vector<8x4xf32>
    %77 = tpu.concatenate %76, %73 in 1 : vector<8x4xf32>, vector<8x4xf32> -> vector<8x8xf32>
    %78 = arith.mulf %72, %20 : vector<8x8xf32>
    %79 = arith.mulf %77, %21 : vector<8x8xf32>
    %80 = arith.addf %78, %79 : vector<8x8xf32>
    %cst_24 = arith.constant 0.353553385 : f32
    %81 = vector.broadcast %cst_24 : f32 to vector<8x8xf32>
    %82 = arith.mulf %80, %81 : vector<8x8xf32>
    %cst_25 = arith.constant dense<0.000000e+00> : vector<8x8xf32>
    %83 = tpu.matmul %82, %36, %cst_25 {dimension_numbers = #tpu.dot_dimension_numbers<[1], [1], [0], [0], [0, 0, 1, 0], [], []>} : vector<8x8xf32>, vector<8x8xf32>, vector<8x8xf32> -> vector<8x8xf32>
    %84 = arith.addf %83, %27 : vector<8x8xf32>
    %cst_26 = arith.constant dense<0xFF800000> : vector<8xf32>
    %85 = vector.multi_reduction <maximumf>, %84, %cst_26 [1] : vector<8x8xf32> to vector<8xf32>
    %86 = vector.shape_cast %85 : vector<8xf32> to vector<8x1xf32>
    %87 = vector.broadcast %86 : vector<8x1xf32> to vector<8x8xf32>
    %88 = arith.subf %84, %87 : vector<8x8xf32>
    %89 = math.exp %88 : vector<8x8xf32>
    %cst_27 = arith.constant dense<0.000000e+00> : vector<8xf32>
    %90 = vector.multi_reduction <add>, %89, %cst_27 [1] : vector<8x8xf32> to vector<8xf32>
    %91 = vector.shape_cast %90 : vector<8xf32> to vector<8x1xf32>
    %92 = tpu.reciprocal %91 {approx = true} : vector<8x1xf32> -> vector<8x1xf32>
    %93 = vector.broadcast %92 : vector<8x1xf32> to vector<8x8xf32>
    %94 = arith.mulf %89, %93 : vector<8x8xf32>
    %cst_28 = arith.constant dense<0.000000e+00> : vector<8x8xf32>
    %95 = tpu.matmul %94, %37, %cst_28 {dimension_numbers = #tpu.dot_dimension_numbers<[1], [0], [0], [1], [0, 0, 1, 1], [], []>} : vector<8x8xf32>, vector<8x8xf32>, vector<8x8xf32> -> vector<8x8xf32>
    %96 = vector.extract_strided_slice %17 {offsets = [0, 16], sizes = [8, 8], strides = [1, 1]} : vector<8x32xf32> to vector<8x8xf32>
    %97 = vector.extract_strided_slice %96 {offsets = [0, 0], sizes = [8, 4], strides = [1, 1]} : vector<8x8xf32> to vector<8x4xf32>
    %98 = vector.extract_strided_slice %96 {offsets = [0, 4], sizes = [8, 4], strides = [1, 1]} : vector<8x8xf32> to vector<8x4xf32>
    %cst_29 = arith.constant 0.000000e+00 : f32
    %99 = vector.broadcast %cst_29 : f32 to vector<8x4xf32>
    %100 = arith.subf %99, %98 : vector<8x4xf32>
    %101 = tpu.concatenate %100, %97 in 1 : vector<8x4xf32>, vector<8x4xf32> -> vector<8x8xf32>
    %102 = arith.mulf %96, %20 : vector<8x8xf32>
    %103 = arith.mulf %101, %21 : vector<8x8xf32>
    %104 = arith.addf %102, %103 : vector<8x8xf32>
    %cst_30 = arith.constant 0.353553385 : f32
    %105 = vector.broadcast %cst_30 : f32 to vector<8x8xf32>
    %106 = arith.mulf %104, %105 : vector<8x8xf32>
    %cst_31 = arith.constant dense<0.000000e+00> : vector<8x8xf32>
    %107 = tpu.matmul %106, %46, %cst_31 {dimension_numbers = #tpu.dot_dimension_numbers<[1], [1], [0], [0], [0, 0, 1, 0], [], []>} : vector<8x8xf32>, vector<8x8xf32>, vector<8x8xf32> -> vector<8x8xf32>
    %108 = arith.addf %107, %27 : vector<8x8xf32>
    %cst_32 = arith.constant dense<0xFF800000> : vector<8xf32>
    %109 = vector.multi_reduction <maximumf>, %108, %cst_32 [1] : vector<8x8xf32> to vector<8xf32>
    %110 = vector.shape_cast %109 : vector<8xf32> to vector<8x1xf32>
    %111 = vector.broadcast %110 : vector<8x1xf32> to vector<8x8xf32>
    %112 = arith.subf %108, %111 : vector<8x8xf32>
    %113 = math.exp %112 : vector<8x8xf32>
    %cst_33 = arith.constant dense<0.000000e+00> : vector<8xf32>
    %114 = vector.multi_reduction <add>, %113, %cst_33 [1] : vector<8x8xf32> to vector<8xf32>
    %115 = vector.shape_cast %114 : vector<8xf32> to vector<8x1xf32>
    %116 = tpu.reciprocal %115 {approx = true} : vector<8x1xf32> -> vector<8x1xf32>
    %117 = vector.broadcast %116 : vector<8x1xf32> to vector<8x8xf32>
    %118 = arith.mulf %113, %117 : vector<8x8xf32>
    %cst_34 = arith.constant dense<0.000000e+00> : vector<8x8xf32>
    %119 = tpu.matmul %118, %47, %cst_34 {dimension_numbers = #tpu.dot_dimension_numbers<[1], [0], [0], [1], [0, 0, 1, 1], [], []>} : vector<8x8xf32>, vector<8x8xf32>, vector<8x8xf32> -> vector<8x8xf32>
    %120 = vector.extract_strided_slice %17 {offsets = [0, 24], sizes = [8, 8], strides = [1, 1]} : vector<8x32xf32> to vector<8x8xf32>
    %121 = vector.extract_strided_slice %120 {offsets = [0, 0], sizes = [8, 4], strides = [1, 1]} : vector<8x8xf32> to vector<8x4xf32>
    %122 = vector.extract_strided_slice %120 {offsets = [0, 4], sizes = [8, 4], strides = [1, 1]} : vector<8x8xf32> to vector<8x4xf32>
    %cst_35 = arith.constant 0.000000e+00 : f32
    %123 = vector.broadcast %cst_35 : f32 to vector<8x4xf32>
    %124 = arith.subf %123, %122 : vector<8x4xf32>
    %125 = tpu.concatenate %124, %121 in 1 : vector<8x4xf32>, vector<8x4xf32> -> vector<8x8xf32>
    %126 = arith.mulf %120, %20 : vector<8x8xf32>
    %127 = arith.mulf %125, %21 : vector<8x8xf32>
    %128 = arith.addf %126, %127 : vector<8x8xf32>
    %cst_36 = arith.constant 0.353553385 : f32
    %129 = vector.broadcast %cst_36 : f32 to vector<8x8xf32>
    %130 = arith.mulf %128, %129 : vector<8x8xf32>
    %cst_37 = arith.constant dense<0.000000e+00> : vector<8x8xf32>
    %131 = tpu.matmul %130, %46, %cst_37 {dimension_numbers = #tpu.dot_dimension_numbers<[1], [1], [0], [0], [0, 0, 1, 0], [], []>} : vector<8x8xf32>, vector<8x8xf32>, vector<8x8xf32> -> vector<8x8xf32>
    %132 = arith.addf %131, %27 : vector<8x8xf32>
    %cst_38 = arith.constant dense<0xFF800000> : vector<8xf32>
    %133 = vector.multi_reduction <maximumf>, %132, %cst_38 [1] : vector<8x8xf32> to vector<8xf32>
    %134 = vector.shape_cast %133 : vector<8xf32> to vector<8x1xf32>
    %135 = vector.broadcast %134 : vector<8x1xf32> to vector<8x8xf32>
    %136 = arith.subf %132, %135 : vector<8x8xf32>
    %137 = math.exp %136 : vector<8x8xf32>
    %cst_39 = arith.constant dense<0.000000e+00> : vector<8xf32>
    %138 = vector.multi_reduction <add>, %137, %cst_39 [1] : vector<8x8xf32> to vector<8xf32>
    %139 = vector.shape_cast %138 : vector<8xf32> to vector<8x1xf32>
    %140 = tpu.reciprocal %139 {approx = true} : vector<8x1xf32> -> vector<8x1xf32>
    %141 = vector.broadcast %140 : vector<8x1xf32> to vector<8x8xf32>
    %142 = arith.mulf %137, %141 : vector<8x8xf32>
    %cst_40 = arith.constant dense<0.000000e+00> : vector<8x8xf32>
    %143 = tpu.matmul %142, %47, %cst_40 {dimension_numbers = #tpu.dot_dimension_numbers<[1], [0], [0], [1], [0, 0, 1, 1], [], []>} : vector<8x8xf32>, vector<8x8xf32>, vector<8x8xf32> -> vector<8x8xf32>
    %144 = tpu.concatenate %71, %95, %119, %143 in 1 : vector<8x8xf32>, vector<8x8xf32>, vector<8x8xf32>, vector<8x8xf32> -> vector<8x32xf32>
    %c0_41 = arith.constant 0 : index
    %c0_42 = arith.constant 0 : index
    %145 = vector.load %arg3[%c0_41, %c0_42] : memref<32x32xf32, #tpu.memory_space<vmem>>, vector<32x32xf32>
    %cst_43 = arith.constant dense<0.000000e+00> : vector<8x32xf32>
    %146 = tpu.matmul %144, %145, %cst_43 {dimension_numbers = #tpu.dot_dimension_numbers<[1], [0], [0], [1], [0, 0, 1, 1], [], []>} : vector<8x32xf32>, vector<32x32xf32>, vector<8x32xf32> -> vector<8x32xf32>
    %147 = arith.addf %1, %146 : vector<8x32xf32>
    %148 = arith.mulf %147, %147 : vector<8x32xf32>
    %cst_44 = arith.constant dense<0.000000e+00> : vector<8xf32>
    %149 = vector.multi_reduction <add>, %148, %cst_44 [1] : vector<8x32xf32> to vector<8xf32>
    %150 = vector.shape_cast %149 : vector<8xf32> to vector<8x1xf32>
    %cst_45 = arith.constant 3.200000e+01 : f32
    %151 = vector.broadcast %cst_45 : f32 to vector<8x1xf32>
    %152 = arith.divf %150, %151 : vector<8x1xf32>
    %cst_46 = arith.constant 9.99999974E-6 : f32
    %153 = vector.broadcast %cst_46 : f32 to vector<8x1xf32>
    %154 = arith.addf %152, %153 : vector<8x1xf32>
    %155 = math.rsqrt %154 : vector<8x1xf32>
    %156 = vector.broadcast %155 : vector<8x1xf32> to vector<8x32xf32>
    %157 = arith.mulf %147, %156 : vector<8x32xf32>
    %c0_47 = arith.constant 0 : index
    %c0_48 = arith.constant 0 : index
    %158 = vector.load %arg7[%c0_47, %c0_48] : memref<1x32xf32, #tpu.memory_space<vmem>>, vector<1x32xf32>
    %159 = vector.broadcast %158 : vector<1x32xf32> to vector<8x32xf32>
    %160 = arith.mulf %157, %159 : vector<8x32xf32>
    %c0_49 = arith.constant 0 : index
    %c0_50 = arith.constant 0 : index
    %161 = vector.load %arg4[%c0_49, %c0_50] : memref<32x128xf32, #tpu.memory_space<vmem>>, vector<32x128xf32>
    %cst_51 = arith.constant dense<0.000000e+00> : vector<8x128xf32>
    %162 = tpu.matmul %160, %161, %cst_51 {dimension_numbers = #tpu.dot_dimension_numbers<[1], [0], [0], [1], [0, 0, 1, 1], [], []>} : vector<8x32xf32>, vector<32x128xf32>, vector<8x128xf32> -> vector<8x128xf32>
    %163 = vector.extract_strided_slice %162 {offsets = [0, 0], sizes = [8, 64], strides = [1, 1]} : vector<8x128xf32> to vector<8x64xf32>
    %164 = vector.extract_strided_slice %162 {offsets = [0, 64], sizes = [8, 64], strides = [1, 1]} : vector<8x128xf32> to vector<8x64xf32>
    %165 = arith.negf %163 : vector<8x64xf32>
    %166 = math.exp %165 : vector<8x64xf32>
    %cst_52 = arith.constant 1.000000e+00 : f32
    %167 = vector.broadcast %cst_52 : f32 to vector<8x64xf32>
    %168 = arith.addf %167, %166 : vector<8x64xf32>
    %169 = arith.divf %167, %168 : vector<8x64xf32>
    %170 = arith.mulf %163, %169 : vector<8x64xf32>
    %171 = arith.mulf %170, %164 : vector<8x64xf32>
    %c0_53 = arith.constant 0 : index
    %c0_54 = arith.constant 0 : index
    %172 = vector.load %arg5[%c0_53, %c0_54] : memref<64x32xf32, #tpu.memory_space<vmem>>, vector<64x32xf32>
    %cst_55 = arith.constant dense<0.000000e+00> : vector<8x32xf32>
    %173 = tpu.matmul %171, %172, %cst_55 {dimension_numbers = #tpu.dot_dimension_numbers<[1], [0], [0], [1], [0, 0, 1, 1], [], []>} : vector<8x64xf32>, vector<64x32xf32>, vector<8x32xf32> -> vector<8x32xf32>
    %174 = arith.addf %147, %173 : vector<8x32xf32>
    %c0_56 = arith.constant 0 : index
    %c0_57 = arith.constant 0 : index
    %c0_58 = arith.constant 0 : index
    %175 = vector.load %arg10[%c0_56, %c0_57, %c0_58] : memref<1x8x32xf32, #tpu.memory_space<vmem>>, vector<1x8x32xf32>
    %176 = vector.shape_cast %175 : vector<1x8x32xf32> to vector<8x32xf32>
    %177 = vector.shape_cast %174 : vector<8x32xf32> to vector<1x8x32xf32>
    tpu.vector_store %arg10[%c0_56, %c0_57, %c0_58], %177 {strides = array<i32>} : memref<1x8x32xf32, #tpu.memory_space<vmem>>, vector<1x8x32xf32>,
    return
  }
  func.func @transform_0(%arg0: i32) -> (i32, i32, i32) {
    %c0_i32 = arith.constant 0 : i32
    %c0_i32_0 = arith.constant 0 : i32
    %c0_i32_1 = arith.constant 0 : i32
    return %arg0, %c0_i32, %c0_i32_0 : i32, i32, i32
  }
  func.func @transform_1(%arg0: i32) -> (i32, i32) {
    %c0_i32 = arith.constant 0 : i32
    %c0_i32_0 = arith.constant 0 : i32
    %c0_i32_1 = arith.constant 0 : i32
    return %c0_i32, %c0_i32_0 : i32, i32
  }
  func.func @transform_2(%arg0: i32) -> (i32, i32) {
    %c0_i32 = arith.constant 0 : i32
    %c0_i32_0 = arith.constant 0 : i32
    %c0_i32_1 = arith.constant 0 : i32
    return %c0_i32, %c0_i32_0 : i32, i32
  }
  func.func @transform_3(%arg0: i32) -> (i32, i32) {
    %c0_i32 = arith.constant 0 : i32
    %c0_i32_0 = arith.constant 0 : i32
    %c0_i32_1 = arith.constant 0 : i32
    return %c0_i32, %c0_i32_0 : i32, i32
  }
  func.func @transform_4(%arg0: i32) -> (i32, i32) {
    %c0_i32 = arith.constant 0 : i32
    %c0_i32_0 = arith.constant 0 : i32
    %c0_i32_1 = arith.constant 0 : i32
    return %c0_i32, %c0_i32_0 : i32, i32
  }
  func.func @transform_5(%arg0: i32) -> (i32, i32) {
    %c0_i32 = arith.constant 0 : i32
    %c0_i32_0 = arith.constant 0 : i32
    %c0_i32_1 = arith.constant 0 : i32
    return %c0_i32, %c0_i32_0 : i32, i32
  }
  func.func @transform_6(%arg0: i32) -> (i32, i32) {
    %c0_i32 = arith.constant 0 : i32
    %c0_i32_0 = arith.constant 0 : i32
    %c0_i32_1 = arith.constant 0 : i32
    return %c0_i32, %c0_i32_0 : i32, i32
  }
  func.func @transform_7(%arg0: i32) -> (i32, i32) {
    %c0_i32 = arith.constant 0 : i32
    %c0_i32_0 = arith.constant 0 : i32
    %c0_i32_1 = arith.constant 0 : i32
    return %c0_i32, %c0_i32_0 : i32, i32
  }
  func.func @transform_8(%arg0: i32) -> (i32, i32) {
    %c0_i32 = arith.constant 0 : i32
    %c0_i32_0 = arith.constant 0 : i32
    %c0_i32_1 = arith.constant 0 : i32
    return %c0_i32, %c0_i32_0 : i32, i32
  }
  func.func @transform_9(%arg0: i32) -> (i32, i32, i32) {
    %c0_i32 = arith.constant 0 : i32
    %c0_i32_0 = arith.constant 0 : i32
    %c0_i32_1 = arith.constant 0 : i32
    return %arg0, %c0_i32, %c0_i32_0 : i32, i32, i32
  }
}

</mosaic_0001>

<llo_original>
// kernel: tpu_custom_call.1
$region0: #{tpu_custom_call.1}
  #allocation0 [shape = 'u32[]', space=smem, size = 0x4, offset = 0x4, fixed_abs, tag = 'smem constant byte address 0x4 - core index']
  #allocation1 [shape = 'u32[144,128]{1,0:T(1,128)}', space=vmem, size = 0x12000, scoped, tag = 'internal scratch']
  %s0 = inlined_call_operand.hbm [shape: f32[2,8,32], index: 0, kind: input, shape index: {}]
  %s1 = inlined_call_operand.vmem [shape: f32[32,64], index: 1, kind: input, shape index: {}]
  %s2 = inlined_call_operand.vmem [shape: f32[32,32], index: 2, kind: input, shape index: {}]
  %s3 = inlined_call_operand.vmem [shape: f32[32,128], index: 3, kind: input, shape index: {}]
  %s4 = inlined_call_operand.vmem [shape: f32[64,32], index: 4, kind: input, shape index: {}]
  %s5 = inlined_call_operand.vmem [shape: f32[1,32], index: 5, kind: input, shape index: {}]
  %s6 = inlined_call_operand.vmem [shape: f32[1,32], index: 6, kind: input, shape index: {}]
  %s7 = inlined_call_operand.vmem [shape: f32[8,8], index: 7, kind: input, shape index: {}]
  %s8 = inlined_call_operand.vmem [shape: f32[8,8], index: 8, kind: input, shape index: {}]
  %s9 = inlined_call_operand.hbm [shape: f32[2,8,32], index: 9, kind: output, shape index: {}]
  %s10 = sld [smem:[#allocation0]]
  $region73: #{tpu_custom_call.1} parent=0
    _
  %s12 = ssub.s32 1, %s10
  %s13 = scalar_select 0, %s12, %s10
  $region1: #{tpu_custom_call.1} parent=0
    #allocation2 [shape = 'u8[8192]{0}', space=vmem, size = 0x2000, scoped, tag = 'input window, operand 0']
    #allocation3 [shape = 's32[2]{0}', space=sflag, size = 0x8, scoped, tag = 'scoped memory for tpu_custom_call.1']
    #allocation4 [shape = 's32[2]{0}', space=sflag, size = 0x8, scoped, tag = 'scoped memory for tpu_custom_call.1']
    #allocation5 [shape = 'u8[8192]{0}', space=vmem, size = 0x2000, scoped, tag = 'output window, operand 0']
    %14 = vsyncpa [#allocation3], 0
    %s15 = scalar_lea.sflag [#allocation3], 1
    %16 = vsyncpa %s15, 0
    %17 = vsyncpa [#allocation4], 0
    %s18 = scalar_lea.sflag [#allocation4], 1
    %19 = vsyncpa %s18, 0
    loop: start=0, step=1, limit=4
    $region2: #{tpu_custom_call.1} parent=1 // loop_pre_header
      _
    $region3: #{tpu_custom_call.1} parent=1 // loop_header
      %s21 = sphi 0, %s25
      %p22 = scmp.ge.s32.totalorder %s21, 4
      %s31 = sphi 0, %s33
      %s34 = sphi 0, %s31
      %s35 = sphi 0, %s34
      %s51 = sphi 0, %s35
      %s55 = sphi 0, %s55
      %s57 = sphi 0, %s55
      %s58 = sphi 0, %s57
      %s72 = sphi 0, %s58
      %s76 = sphi 0, %s76
      %s78 = sphi 0, %s76
      %s79 = sphi 0, %s78
      %s93 = sphi 0, %s79
      %s97 = sphi 0, %s97
      %s99 = sphi 0, %s97
      %s100 = sphi 0, %s99
      %s114 = sphi 0, %s100
      %s118 = sphi 0, %s118
      %s120 = sphi 0, %s118
      %s121 = sphi 0, %s120
      %s135 = sphi 0, %s121
      %s139 = sphi 0, %s139
      %s141 = sphi 0, %s139
      %s142 = sphi 0, %s141
      %s156 = sphi 0, %s142
      %s160 = sphi 0, %s160
      %s162 = sphi 0, %s160
      %s163 = sphi 0, %s162
      %s177 = sphi 0, %s163
      %s181 = sphi 0, %s181
      %s183 = sphi 0, %s181
      %s184 = sphi 0, %s183
      %s198 = sphi 0, %s184
      %s202 = sphi 0, %s202
      %s204 = sphi 0, %s202
      %s205 = sphi 0, %s204
      %s219 = sphi 0, %s205
      %s225 = sphi 0, %s227
      %s228 = sphi 0, %s225
      %s229 = sphi 0, %s228
      %s245 = sphi 0, %s229
    $region4: #{tpu_custom_call.1} parent=1 // loop_header_branch
      %24 = sbr.rel (%p22) target = $region8
    $region5: #{tpu_custom_call.1} parent=1 // loop_body
      %s26 = ssub.s32 %s21, 1
      %s27 = ssub.s32 %s21, 2
      %s28 = sadd.s32 %s21, 1
      %s29 = ssub.s32 %s21, %s28
      %p30 = scmp.eq.s32.totalorder %s29, 0
      %s32 = sadd.s32 %s31, 1
      %s33 = scalar_select %p30, %s31, %s32
      %p36 = pneg %p30
      %p37 = scmp.eq.s32.totalorder %s21, 1
      %p38 = por %p36, %p37
      %p39 = scmp.ne.s32.totalorder %s31, %s34
      %p40 = scmp.eq.s32.totalorder %s21, 0
      %p41 = por %p39, %p40
      %p42 = scmp.ne.s32.totalorder %s31, %s34
      %p43 = scmp.eq.s32.totalorder %s26, 1
      %p44 = por %p42, %p43
      %p45 = scmp.ne.s32.totalorder %s34, %s35
      %p46 = scmp.eq.s32.totalorder %s26, 0
      %p47 = por %p45, %p46
      %p48 = scmp.ne.s32.totalorder %s34, %s35
      %p49 = scmp.eq.s32.totalorder %s27, 1
      %p50 = por %p48, %p49
      %p52 = scmp.ne.s32.totalorder %s35, %s51
      %p53 = scmp.eq.s32.totalorder %s27, 0
      %p54 = por %p52, %p53
      %s56 = sadd.s32 %s55, 1
      %p59 = scmp.eq.s32.totalorder %s21, 1
      %p60 = scmp.ne.s32.totalorder %s55, %s57
      %p61 = scmp.eq.s32.totalorder %s21, 0
      %p62 = por %p60, %p61
      %p63 = scmp.ne.s32.totalorder %s55, %s57
      %p64 = scmp.eq.s32.totalorder %s26, 1
      %p65 = por %p63, %p64
      %p66 = scmp.ne.s32.totalorder %s57, %s58
      %p67 = scmp.eq.s32.totalorder %s26, 0
      %p68 = por %p66, %p67
      %p69 = scmp.ne.s32.totalorder %s57, %s58
      %p70 = scmp.eq.s32.totalorder %s27, 1
      %p71 = por %p69, %p70
      %p73 = scmp.ne.s32.totalorder %s58, %s72
      %p74 = scmp.eq.s32.totalorder %s27, 0
      %p75 = por %p73, %p74
      %s77 = sadd.s32 %s76, 1
      %p80 = scmp.eq.s32.totalorder %s21, 1
      %p81 = scmp.ne.s32.totalorder %s76, %s78
      %p82 = scmp.eq.s32.totalorder %s21, 0
      %p83 = por %p81, %p82
      %p84 = scmp.ne.s32.totalorder %s76, %s78
      %p85 = scmp.eq.s32.totalorder %s26, 1
      %p86 = por %p84, %p85
      %p87 = scmp.ne.s32.totalorder %s78, %s79
      %p88 = scmp.eq.s32.totalorder %s26, 0
      %p89 = por %p87, %p88
      %p90 = scmp.ne.s32.totalorder %s78, %s79
      %p91 = scmp.eq.s32.totalorder %s27, 1
      %p92 = por %p90, %p91
      %p94 = scmp.ne.s32.totalorder %s79, %s93
      %p95 = scmp.eq.s32.totalorder %s27, 0
      %p96 = por %p94, %p95
      %s98 = sadd.s32 %s97, 1
      %p101 = scmp.eq.s32.totalorder %s21, 1
      %p102 = scmp.ne.s32.totalorder %s97, %s99
      %p103 = scmp.eq.s32.totalorder %s21, 0
      %p104 = por %p102, %p103
      %p105 = scmp.ne.s32.totalorder %s97, %s99
      %p106 = scmp.eq.s32.totalorder %s26, 1
      %p107 = por %p105, %p106
      %p108 = scmp.ne.s32.totalorder %s99, %s100
      %p109 = scmp.eq.s32.totalorder %s26, 0
      %p110 = por %p108, %p109
      %p111 = scmp.ne.s32.totalorder %s99, %s100
      %p112 = scmp.eq.s32.totalorder %s27, 1
      %p113 = por %p111, %p112
      %p115 = scmp.ne.s32.totalorder %s100, %s114
      %p116 = scmp.eq.s32.totalorder %s27, 0
      %p117 = por %p115, %p116
      %s119 = sadd.s32 %s118, 1
      %p122 = scmp.eq.s32.totalorder %s21, 1
      %p123 = scmp.ne.s32.totalorder %s118, %s120
      %p124 = scmp.eq.s32.totalorder %s21, 0
      %p125 = por %p123, %p124
      %p126 = scmp.ne.s32.totalorder %s118, %s120
      %p127 = scmp.eq.s32.totalorder %s26, 1
      %p128 = por %p126, %p127
      %p129 = scmp.ne.s32.totalorder %s120, %s121
      %p130 = scmp.eq.s32.totalorder %s26, 0
      %p131 = por %p129, %p130
      %p132 = scmp.ne.s32.totalorder %s120, %s121
      %p133 = scmp.eq.s32.totalorder %s27, 1
      %p134 = por %p132, %p133
      %p136 = scmp.ne.s32.totalorder %s121, %s135
      %p137 = scmp.eq.s32.totalorder %s27, 0
      %p138 = por %p136, %p137
      %s140 = sadd.s32 %s139, 1
      %p143 = scmp.eq.s32.totalorder %s21, 1
      %p144 = scmp.ne.s32.totalorder %s139, %s141
      %p145 = scmp.eq.s32.totalorder %s21, 0
      %p146 = por %p144, %p145
      %p147 = scmp.ne.s32.totalorder %s139, %s141
      %p148 = scmp.eq.s32.totalorder %s26, 1
      %p149 = por %p147, %p148
      %p150 = scmp.ne.s32.totalorder %s141, %s142
      %p151 = scmp.eq.s32.totalorder %s26, 0
      %p152 = por %p150, %p151
      %p153 = scmp.ne.s32.totalorder %s141, %s142
      %p154 = scmp.eq.s32.totalorder %s27, 1
      %p155 = por %p153, %p154
      %p157 = scmp.ne.s32.totalorder %s142, %s156
      %p158 = scmp.eq.s32.totalorder %s27, 0
      %p159 = por %p157, %p158
      %s161 = sadd.s32 %s160, 1
      %p164 = scmp.eq.s32.totalorder %s21, 1
      %p165 = scmp.ne.s32.totalorder %s160, %s162
      %p166 = scmp.eq.s32.totalorder %s21, 0
      %p167 = por %p165, %p166
      %p168 = scmp.ne.s32.totalorder %s160, %s162
      %p169 = scmp.eq.s32.totalorder %s26, 1
      %p170 = por %p168, %p169
      %p171 = scmp.ne.s32.totalorder %s162, %s163
      %p172 = scmp.eq.s32.totalorder %s26, 0
      %p173 = por %p171, %p172
      %p174 = scmp.ne.s32.totalorder %s162, %s163
      %p175 = scmp.eq.s32.totalorder %s27, 1
      %p176 = por %p174, %p175
      %p178 = scmp.ne.s32.totalorder %s163, %s177
      %p179 = scmp.eq.s32.totalorder %s27, 0
      %p180 = por %p178, %p179
      %s182 = sadd.s32 %s181, 1
      %p185 = scmp.eq.s32.totalorder %s21, 1
      %p186 = scmp.ne.s32.totalorder %s181, %s183
      %p187 = scmp.eq.s32.totalorder %s21, 0
      %p188 = por %p186, %p187
      %p189 = scmp.ne.s32.totalorder %s181, %s183
      %p190 = scmp.eq.s32.totalorder %s26, 1
      %p191 = por %p189, %p190
      %p192 = scmp.ne.s32.totalorder %s183, %s184
      %p193 = scmp.eq.s32.totalorder %s26, 0
      %p194 = por %p192, %p193
      %p195 = scmp.ne.s32.totalorder %s183, %s184
      %p196 = scmp.eq.s32.totalorder %s27, 1
      %p197 = por %p195, %p196
      %p199 = scmp.ne.s32.totalorder %s184, %s198
      %p200 = scmp.eq.s32.totalorder %s27, 0
      %p201 = por %p199, %p200
      %s203 = sadd.s32 %s202, 1
      %p206 = scmp.eq.s32.totalorder %s21, 1
      %p207 = scmp.ne.s32.totalorder %s202, %s204
      %p208 = scmp.eq.s32.totalorder %s21, 0
      %p209 = por %p207, %p208
      %p210 = scmp.ne.s32.totalorder %s202, %s204
      %p211 = scmp.eq.s32.totalorder %s26, 1
      %p212 = por %p210, %p211
      %p213 = scmp.ne.s32.totalorder %s204, %s205
      %p214 = scmp.eq.s32.totalorder %s26, 0
      %p215 = por %p213, %p214
      %p216 = scmp.ne.s32.totalorder %s204, %s205
      %p217 = scmp.eq.s32.totalorder %s27, 1
      %p218 = por %p216, %p217
      %p220 = scmp.ne.s32.totalorder %s205, %s219
      %p221 = scmp.eq.s32.totalorder %s27, 0
      %p222 = por %p220, %p221
      %s223 = ssub.s32 %s21, %s28
      %p224 = scmp.eq.s32.totalorder %s223, 0
      %s226 = sadd.s32 %s225, 1
      %s227 = scalar_select %p224, %s225, %s226
      %p230 = pneg %p224
      %p231 = scmp.eq.s32.totalorder %s21, 1
      %p232 = por %p230, %p231
      %p233 = scmp.ne.s32.totalorder %s225, %s228
      %p234 = scmp.eq.s32.totalorder %s21, 0
      %p235 = por %p233, %p234
      %p236 = scmp.ne.s32.totalorder %s225, %s228
      %p237 = scmp.eq.s32.totalorder %s26, 1
      %p238 = por %p236, %p237
      %p239 = scmp.ne.s32.totalorder %s228, %s229
      %p240 = scmp.eq.s32.totalorder %s26, 0
      %p241 = por %p239, %p240
      %p242 = scmp.ne.s32.totalorder %s228, %s229
      %p243 = scmp.eq.s32.totalorder %s27, 1
      %p244 = por %p242, %p243
      %p246 = scmp.ne.s32.totalorder %s229, %s245
      %p247 = scmp.eq.s32.totalorder %s27, 0
      %p248 = por %p246, %p247
      %p249 = scmp.le.s32.totalorder 1, %s21
      %p250 = scmp.lt.s32.totalorder %s21, 3
      %p251 = pnand %p249, %p250
      %p252 = pneg %p251
      // Predicated region
      $region9: #{tpu_custom_call.1} parent=5 // pred_check
        _
      $region10: #{tpu_custom_call.1} parent=5 // pred_check_branch
        %254 = sbr.rel (%p251) target = $region12
      $region11: #{tpu_custom_call.1} parent=5 // pred_region
        %s255 = ssub.s32 %s21, 1
        // Predicated region
        $region13: #{tpu_custom_call.1} parent=11 // pred_check
          %p256 = pneg %p68
        $region14: #{tpu_custom_call.1} parent=11 // pred_check_branch
          %258 = sbr.rel (%p256) target = $region16
        $region15: #{tpu_custom_call.1} parent=11 // pred_region
          _
        $region16: #{tpu_custom_call.1} parent=11 // pred_fallthru
          _
        // Predicated region
        $region17: #{tpu_custom_call.1} parent=11 // pred_check
          %p259 = pneg %p89
        $region18: #{tpu_custom_call.1} parent=11 // pred_check_branch
          %261 = sbr.rel (%p259) target = $region20
        $region19: #{tpu_custom_call.1} parent=11 // pred_region
          _
        $region20: #{tpu_custom_call.1} parent=11 // pred_fallthru
          _
        // Predicated region
        $region21: #{tpu_custom_call.1} parent=11 // pred_check
          %p262 = pneg %p110
        $region22: #{tpu_custom_call.1} parent=11 // pred_check_branch
          %264 = sbr.rel (%p262) target = $region24
        $region23: #{tpu_custom_call.1} parent=11 // pred_region
          _
        $region24: #{tpu_custom_call.1} parent=11 // pred_fallthru
          _
        // Predicated region
        $region25: #{tpu_custom_call.1} parent=11 // pred_check
          %p265 = pneg %p131
        $region26: #{tpu_custom_call.1} parent=11 // pred_check_branch
          %267 = sbr.rel (%p265) target = $region28
        $region27: #{tpu_custom_call.1} parent=11 // pred_region
          _
        $region28: #{tpu_custom_call.1} parent=11 // pred_fallthru
          _
        // Predicated region
        $region29: #{tpu_custom_call.1} parent=11 // pred_check
          %p268 = pneg %p152
        $region30: #{tpu_custom_call.1} parent=11 // pred_check_branch
          %270 = sbr.rel (%p268) target = $region32
        $region31: #{tpu_custom_call.1} parent=11 // pred_region
          _
        $region32: #{tpu_custom_call.1} parent=11 // pred_fallthru
          _
        // Predicated region
        $region33: #{tpu_custom_call.1} parent=11 // pred_check
          %p271 = pneg %p173
        $region34: #{tpu_custom_call.1} parent=11 // pred_check_branch
          %273 = sbr.rel (%p271) target = $region36
        $region35: #{tpu_custom_call.1} parent=11 // pred_region
          _
        $region36: #{tpu_custom_call.1} parent=11 // pred_fallthru
          _
        // Predicated region
        $region37: #{tpu_custom_call.1} parent=11 // pred_check
          %p274 = pneg %p194
        $region38: #{tpu_custom_call.1} parent=11 // pred_check_branch
          %276 = sbr.rel (%p274) target = $region40
        $region39: #{tpu_custom_call.1} parent=11 // pred_region
          _
        $region40: #{tpu_custom_call.1} parent=11 // pred_fallthru
          _
        // Predicated region
        $region41: #{tpu_custom_call.1} parent=11 // pred_check
          %p277 = pneg %p215
        $region42: #{tpu_custom_call.1} parent=11 // pred_check_branch
          %279 = sbr.rel (%p277) target = $region44
        $region43: #{tpu_custom_call.1} parent=11 // pred_region
          _
        $region44: #{tpu_custom_call.1} parent=11 // pred_fallthru
          _
      $region12: #{tpu_custom_call.1} parent=5 // pred_fallthru
        _
      %p280 = scmp.lt.s32.totalorder %s21, 2
      // Predicated region
      $region45: #{tpu_custom_call.1} parent=5 // pred_check
        %p281 = pneg %p280
      $region46: #{tpu_custom_call.1} parent=5 // pred_check_branch
        %283 = sbr.rel (%p281) target = $region48
      $region47: #{tpu_custom_call.1} parent=5 // pred_region
        // Predicated region
        $region49: #{tpu_custom_call.1} parent=47 // pred_check
          %p284 = pneg %p41
        $region50: #{tpu_custom_call.1} parent=47 // pred_check_branch
          %286 = sbr.rel (%p284) target = $region52
        $region51: #{tpu_custom_call.1} parent=47 // pred_region
          %s287 = sand.u32 %s31, 1
          %s288 = scalar_lea.sflag [#allocation3], %s287
          %s289 = sand.u32 %s31, 1
          %s290 = smul.addr %s289, 8
          %s291 = scalar_lea.vmem [#allocation2], %s290
          %s293 = ssub.s32 128, 128
          %294 = vsyncadd %s288, %s293
          %s295 = smul.addr %s21, 128
          %s296 = scalar_lea.hbm %s0, %s295
          %s298 = sshll.u32 %s291, 4
          %s299 = int_to_ptr.vmem [resolvable:$true] %s298
          %301 = dma.hbm_to_vmem [thread:$0]  %s296, 128, %s299, %s288
        $region52: #{tpu_custom_call.1} parent=47 // pred_fallthru
          _
      $region48: #{tpu_custom_call.1} parent=5 // pred_fallthru
        _
      %p302 = scmp.le.s32.totalorder 1, %s21
      %p303 = scmp.lt.s32.totalorder %s21, 3
      %p304 = pnand %p302, %p303
      %p305 = pneg %p304
      // Predicated region
      $region53: #{tpu_custom_call.1} parent=5 // pred_check
        _
      $region54: #{tpu_custom_call.1} parent=5 // pred_check_branch
        %307 = sbr.rel (%p304) target = $region56
      $region55: #{tpu_custom_call.1} parent=5 // pred_region
        %s308 = ssub.s32 %s21, 1
        %s309 = sand.u32 %s34, 1
        %s310 = scalar_lea.sflag [#allocation3], %s309
        %s311 = sand.u32 %s34, 1
        %s312 = smul.addr %s311, 8
        %s313 = scalar_lea.vmem [#allocation2], %s312
        // Predicated region
        $region57: #{tpu_custom_call.1} parent=55 // pred_check
          %p314 = pneg %p47
        $region58: #{tpu_custom_call.1} parent=55 // pred_check_branch
          %316 = sbr.rel (%p314) target = $region60
        $region59: #{tpu_custom_call.1} parent=55 // pred_region
          %317 = dma.done %s310, 128
        $region60: #{tpu_custom_call.1} parent=55 // pred_fallthru
          _
        %s318 = sand.u32 %s34, 1
        %s319 = scalar_lea.sflag [#allocation3], %s318
        %s320 = sand.u32 %s34, 1
        %s321 = smul.addr %s320, 8
        %s322 = scalar_lea.vmem [#allocation2], %s321
        %p323 = pneg %p47
        %p324 = pneg %p44
        %p325 = pneg %p68
        %p326 = pneg %p65
        %p327 = pneg %p89
        %p328 = pneg %p86
        %p329 = pneg %p110
        %p330 = pneg %p107
        %p331 = pneg %p131
        %p332 = pneg %p128
        %p333 = pneg %p152
        %p334 = pneg %p149
        %p335 = pneg %p173
        %p336 = pneg %p170
        %p337 = pneg %p194
        %p338 = pneg %p191
        %p339 = pneg %p215
        %p340 = pneg %p212
        %p341 = pneg %p241
        %p342 = pneg %p238
        %s343 = sand.u32 %s228, 1
        %s344 = scalar_lea.sflag [#allocation4], %s343
        %s345 = sand.u32 %s228, 1
        %s346 = smul.addr %s345, 8
        %s347 = scalar_lea.vmem [#allocation5], %s346
        %v348 = vld [vmem:[%s313] sm:$0xff]
        %v349 = vmul.f32 %v348, %v348
        %vm350 = vcmask 261120
        %v351 = vsel %vm350, %v349, 0.0
        %352 = vadd.xlane.f32.xlu0 %v351
        %v353 = vpop.xlane.xlu0 %352
        %v354 = vrcp.pop 32.0
        %v355 = vmul.f32 %v353, %v354
        %v356 = vadd.f32 %v355, 1e-05
        %v357 = vrsqrt.pop %v356
        %v358 = vmul.f32 %v348, %v357
        %v359 = vld [vmem:[%s5] sm:$0x1]
        %v361 = vlaneseq
        %v362 = vshrl.u32 %v361, 7
        %v363 = vsub.s32 0, %v362
        %v364 = vrot.slane %v359, %v363
        %v366 = vmul.f32 %v358, %v364
        %v367 = vld [vmem:[%s1] sm:$0xff]
        %v368 = vld [vmem:[%s1 + $0x8] sm:$0xff]
        %v369 = vld [vmem:[%s1 + $0x10] sm:$0xff]
        %v370 = vld [vmem:[%s1 + $0x18] sm:$0xff]
        %v372 = vsel %vm350, %v366, 0
        %374 = vmatprep.subr.mxu0 0.0
        %375 = vmatpush1.msra.mxu0 %v367
        %376 = vmatprep.subr.mxu0 0.0
        %377 = vmatpush1.msra.mxu0 %v368
        %378 = vmatprep.subr.mxu0 0.0
        %379 = vmatpush1.msra.mxu0 %v369
        %380 = vmatprep.subr.mxu0 0.0
        %381 = vmatpush1.msra.mxu0 %v370
        %382 = vmatprep.subr.mxu0 0.0
        %383 = vmatpush1.msra.mxu0 0.0
        %384 = vmatprep.subr.mxu0 0.0
        %385 = vmatpush1.msra.mxu0 0.0
        %386 = vmatprep.subr.mxu0 0.0
        %387 = vmatpush1.msra.mxu0 0.0
        %388 = vmatprep.subr.mxu0 0.0
        %389 = vmatpush1.msra.mxu0 0.0
        %390 = vmatprep.subr.mxu0 0.0
        %391 = vmatpush1.msra.mxu0 0.0
        %392 = vmatprep.subr.mxu0 0.0
        %393 = vmatpush1.msra.mxu0 0.0
        %394 = vmatprep.subr.mxu0 0.0
        %395 = vmatpush1.msra.mxu0 0.0
        %396 = vmatprep.subr.mxu0 0.0
        %397 = vmatpush1.msra.mxu0 0.0
        %398 = vmatprep.subr.mxu0 0.0
        %399 = vmatpush1.msra.mxu0 0.0
        %400 = vmatprep.subr.mxu0 0.0
        %401 = vmatpush1.msra.mxu0 0.0
        %402 = vmatprep.subr.mxu0 0.0
        %403 = vmatpush1.msra.mxu0 0.0
        %404 = vmatprep.subr.mxu0 0.0
        %405 = vmatpush1.msra.mxu0 0.0
        %406 = vmatprep.subr.mxu0 0.0
        %407 = vmatpush1.msra.mxu0 0.0
        %408 = vmatprep.subr.mxu0 0.0
        %409 = vmatpush1.msra.mxu0 0.0
        %410 = vmatprep.subr.mxu0 0.0
        %411 = vmatpush1.msra.mxu0 0.0
        %412 = vmatprep.subr.mxu0 0.0
        %413 = vmatpush1.msra.mxu0 0.0
        %414 = vmatprep.subr.mxu0 0.0
        %415 = vmatpush1.msra.mxu0 0.0
        %416 = vmatprep.subr.mxu0 0.0
        %417 = vmatpush1.msra.mxu0 0.0
        %418 = vmatprep.subr.mxu0 0.0
        %419 = vmatpush1.msra.mxu0 0.0
        %420 = vmatprep.subr.mxu0 0.0
        %421 = vmatpush1.msra.mxu0 0.0
        %422 = vmatprep.subr.mxu0 0.0
        %423 = vmatpush1.msra.mxu0 0.0
        %424 = vmatprep.subr.mxu0 0.0
        %425 = vmatpush1.msra.mxu0 0.0
        %426 = vmatprep.subr.mxu0 0.0
        %427 = vmatpush1.msra.mxu0 0.0
        %428 = vmatprep.subr.mxu0 0.0
        %429 = vmatpush1.msra.mxu0 0.0
        %430 = vmatprep.subr.mxu0 0.0
        %431 = vmatpush1.msra.mxu0 0.0
        %432 = vmatprep.subr.mxu0 0.0
        %433 = vmatpush1.msra.mxu0 0.0
        %434 = vmatprep.subr.mxu0 0.0
        %435 = vmatpush1.msra.mxu0 0.0
        %436 = vmatprep.subr.mxu0 0.0
        %437 = vmatpush1.msra.mxu0 0.0
        %438 = vmatprep.mubr.f32.mxu0 0.0
        %439 = vmatmul.mubr.f32.gmra.mrb[0].mxu0 %v372
        %v440 = vpop.f32.mrb[0].mxu0
        %v441 = vadd.f32 0.0, %v440
        %v442 = vpop.f32.mrb[0].mxu0
        %443 = vdwg.mxu0
        %v444 = vld [vmem:[%s7] sm:$0xff]
        %v445 = vld [vmem:[%s8] sm:$0xff]
        %v446 = vlaneseq
        %v447 = vshrl.u32 %v446, 7
        %v448 = vlaneseq
        %v449 = vand.u32 %v448, 127
        %vm450 = vcmp.gt.s32.totalorder %v449, %v447
        %v451 = vsel %vm450, -1e+30, 0.0
        %v452 = vsub.f32 0.0, %v441
        %454 = vrot.lane.b32.xlu0 %v452, 92
        %v455 = vpop.permute.xlu0 %454
        %458 = vrot.lane.b32.xlu0 %v441, 100
        %v459 = vpop.permute.xlu0 %458
        %vm461 = vcmask 31744
        %v462 = vsel %vm461, %v455, %v459
        %464 = vrot.lane.b32.xlu0 %v444, 32
        %v465 = vpop.permute.xlu0 %464
        %v467 = vmul.f32 %v441, %v465
        %v468 = vmul.f32 %v462, %v445
        %470 = vrot.lane.b32.xlu0 %v468, 32
        %v471 = vpop.permute.xlu0 %470
        %v473 = vadd.f32 %v467, %v471
        %474 = vrot.lane.b32.xlu0 %v452, 84
        %v475 = vpop.permute.xlu0 %474
        %477 = vrot.lane.b32.xlu0 %v441, 92
        %v478 = vpop.permute.xlu0 %477
        %v480 = vsel %vm461, %v475, %v478
        %481 = vrot.lane.b32.xlu0 %v444, 40
        %v482 = vpop.permute.xlu0 %481
        %v484 = vmul.f32 %v441, %v482
        %v485 = vmul.f32 %v480, %v445
        %487 = vrot.lane.b32.xlu0 %v485, 40
        %v488 = vpop.permute.xlu0 %487
        %v490 = vadd.f32 %v484, %v488
        %491 = vrot.lane.b32.xlu0 %v452, 124
        %v492 = vpop.permute.xlu0 %491
        %494 = vrot.lane.b32.xlu0 %v441, 4
        %v495 = vpop.permute.xlu0 %494
        %v497 = vsel %vm461, %v492, %v495
        %v498 = vmul.f32 %v441, %v444
        %v499 = vmul.f32 %v497, %v445
        %v500 = vadd.f32 %v498, %v499
        %v501 = vmul.f32 %v500, 0.35355338
        %503 = vrot.lane.b32.xlu0 %v473, 96
        %v504 = vpop.permute.xlu0 %503
        %vm505 = vcmask 64512
        %v507 = vsel %vm505, %v501, 0
        %v509 = vsel %vm505, %v504, 0
        %511 = vmatprep.subr.mxu0 0.0
        %512 = vmatpush1.xpose.msra.mxu0 %v509
        %513 = vmatprep.subr.mxu0 0.0
        %514 = vmatpush1.xpose.msra.mxu0 0.0
        %515 = vmatprep.subr.mxu0 0.0
        %516 = vmatpush1.xpose.msra.mxu0 0.0
        %517 = vmatprep.subr.mxu0 0.0
        %518 = vmatpush1.xpose.msra.mxu0 0.0
        %519 = vmatprep.subr.mxu0 0.0
        %520 = vmatpush1.xpose.msra.mxu0 0.0
        %521 = vmatprep.subr.mxu0 0.0
        %522 = vmatpush1.xpose.msra.mxu0 0.0
        %523 = vmatprep.subr.mxu0 0.0
        %524 = vmatpush1.xpose.msra.mxu0 0.0
        %525 = vmatprep.subr.mxu0 0.0
        %526 = vmatpush1.xpose.msra.mxu0 0.0
        %527 = vmatprep.subr.mxu0 0.0
        %528 = vmatpush1.xpose.msra.mxu0 0.0
        %529 = vmatprep.subr.mxu0 0.0
        %530 = vmatpush1.xpose.msra.mxu0 0.0
        %531 = vmatprep.subr.mxu0 0.0
        %532 = vmatpush1.xpose.msra.mxu0 0.0
        %533 = vmatprep.subr.mxu0 0.0
        %534 = vmatpush1.xpose.msra.mxu0 0.0
        %535 = vmatprep.subr.mxu0 0.0
        %536 = vmatpush1.xpose.msra.mxu0 0.0
        %537 = vmatprep.subr.mxu0 0.0
        %538 = vmatpush1.xpose.msra.mxu0 0.0
        %539 = vmatprep.subr.mxu0 0.0
        %540 = vmatpush1.xpose.msra.mxu0 0.0
        %541 = vmatprep.subr.mxu0 0.0
        %542 = vmatpush1.xpose.msra.mxu0 0.0
        %543 = vmatprep.subr.mxu0 0.0
        %544 = vmatpush1.xpose.msra.mxu0 0.0
        %545 = vmatprep.subr.mxu0 0.0
        %546 = vmatpush1.xpose.msra.mxu0 0.0
        %547 = vmatprep.subr.mxu0 0.0
        %548 = vmatpush1.xpose.msra.mxu0 0.0
        %549 = vmatprep.subr.mxu0 0.0
        %550 = vmatpush1.xpose.msra.mxu0 0.0
        %551 = vmatprep.subr.mxu0 0.0
        %552 = vmatpush1.xpose.msra.mxu0 0.0
        %553 = vmatprep.subr.mxu0 0.0
        %554 = vmatpush1.xpose.msra.mxu0 0.0
        %555 = vmatprep.subr.mxu0 0.0
        %556 = vmatpush1.xpose.msra.mxu0 0.0
        %557 = vmatprep.subr.mxu0 0.0
        %558 = vmatpush1.xpose.msra.mxu0 0.0
        %559 = vmatprep.subr.mxu0 0.0
        %560 = vmatpush1.xpose.msra.mxu0 0.0
        %561 = vmatprep.subr.mxu0 0.0
        %562 = vmatpush1.xpose.msra.mxu0 0.0
        %563 = vmatprep.subr.mxu0 0.0
        %564 = vmatpush1.xpose.msra.mxu0 0.0
        %565 = vmatprep.subr.mxu0 0.0
        %566 = vmatpush1.xpose.msra.mxu0 0.0
        %567 = vmatprep.subr.mxu0 0.0
        %568 = vmatpush1.xpose.msra.mxu0 0.0
        %569 = vmatprep.subr.mxu0 0.0
        %570 = vmatpush1.xpose.msra.mxu0 0.0
        %571 = vmatprep.subr.mxu0 0.0
        %572 = vmatpush1.xpose.msra.mxu0 0.0
        %573 = vmatprep.subr.mxu0 0.0
        %574 = vmatpush1.xpose.msra.mxu0 0.0
        %575 = vmatprep.mubr.f32.mxu0 0.0
        %576 = vmatmul.mubr.f32.gmra.mrb[0].mxu0 %v507
        %v577 = vpop.f32.mrb[0].mxu0
        %v578 = vadd.f32 %v451, %v577
        %v579 = vpop.f32.mrb[0].mxu0
        %580 = vdwg.mxu0
        %v581 = vsel %vm505, %v578, -inf
        %582 = vmax.xlane.f32.xlu0 %v581
        %v583 = vpop.xlane.xlu0 %582
        %v584 = vsub.f32 %v578, %v583
        %v585 = vmul.f32 %v584, 1.442695
        %v586 = vpow.pop %v585
        %v587 = vsel %vm505, %v586, 0.0
        %588 = vadd.xlane.f32.xlu0 %v587
        %v589 = vpop.xlane.xlu0 %588
        %v590 = vrcp.pop %v589
        %v591 = vmul.f32 %v586, %v590
        %592 = vrot.lane.b32.xlu0 %v441, 80
        %v593 = vpop.permute.xlu0 %592
        %v596 = vsel %vm505, %v591, 0
        %598 = vmatprep.subr.mxu0 0.0
        %599 = vmatpush1.msra.mxu0 %v593
        %600 = vmatprep.subr.mxu0 0.0
        %601 = vmatpush1.msra.mxu0 0.0
        %602 = vmatprep.subr.mxu0 0.0
        %603 = vmatpush1.msra.mxu0 0.0
        %604 = vmatprep.subr.mxu0 0.0
        %605 = vmatpush1.msra.mxu0 0.0
        %606 = vmatprep.subr.mxu0 0.0
        %607 = vmatpush1.msra.mxu0 0.0
        %608 = vmatprep.subr.mxu0 0.0
        %609 = vmatpush1.msra.mxu0 0.0
        %610 = vmatprep.subr.mxu0 0.0
        %611 = vmatpush1.msra.mxu0 0.0
        %612 = vmatprep.subr.mxu0 0.0
        %613 = vmatpush1.msra.mxu0 0.0
        %614 = vmatprep.subr.mxu0 0.0
        %615 = vmatpush1.msra.mxu0 0.0
        %616 = vmatprep.subr.mxu0 0.0
        %617 = vmatpush1.msra.mxu0 0.0
        %618 = vmatprep.subr.mxu0 0.0
        %619 = vmatpush1.msra.mxu0 0.0
        %620 = vmatprep.subr.mxu0 0.0
        %621 = vmatpush1.msra.mxu0 0.0
        %622 = vmatprep.subr.mxu0 0.0
        %623 = vmatpush1.msra.mxu0 0.0
        %624 = vmatprep.subr.mxu0 0.0
        %625 = vmatpush1.msra.mxu0 0.0
        %626 = vmatprep.subr.mxu0 0.0
        %627 = vmatpush1.msra.mxu0 0.0
        %628 = vmatprep.subr.mxu0 0.0
        %629 = vmatpush1.msra.mxu0 0.0
        %630 = vmatprep.subr.mxu0 0.0
        %631 = vmatpush1.msra.mxu0 0.0
        %632 = vmatprep.subr.mxu0 0.0
        %633 = vmatpush1.msra.mxu0 0.0
        %634 = vmatprep.subr.mxu0 0.0
        %635 = vmatpush1.msra.mxu0 0.0
        %636 = vmatprep.subr.mxu0 0.0
        %637 = vmatpush1.msra.mxu0 0.0
        %638 = vmatprep.subr.mxu0 0.0
        %639 = vmatpush1.msra.mxu0 0.0
        %640 = vmatprep.subr.mxu0 0.0
        %641 = vmatpush1.msra.mxu0 0.0
        %642 = vmatprep.subr.mxu0 0.0
        %643 = vmatpush1.msra.mxu0 0.0
        %644 = vmatprep.subr.mxu0 0.0
        %645 = vmatpush1.msra.mxu0 0.0
        %646 = vmatprep.subr.mxu0 0.0
        %647 = vmatpush1.msra.mxu0 0.0
        %648 = vmatprep.subr.mxu0 0.0
        %649 = vmatpush1.msra.mxu0 0.0
        %650 = vmatprep.subr.mxu0 0.0
        %651 = vmatpush1.msra.mxu0 0.0
        %652 = vmatprep.subr.mxu0 0.0
        %653 = vmatpush1.msra.mxu0 0.0
        %654 = vmatprep.subr.mxu0 0.0
        %655 = vmatpush1.msra.mxu0 0.0
        %656 = vmatprep.subr.mxu0 0.0
        %657 = vmatpush1.msra.mxu0 0.0
        %658 = vmatprep.subr.mxu0 0.0
        %659 = vmatpush1.msra.mxu0 0.0
        %660 = vmatprep.subr.mxu0 0.0
        %661 = vmatpush1.msra.mxu0 0.0
        %662 = vmatprep.mubr.f32.mxu0 0.0
        %663 = vmatmul.mubr.f32.gmra.mrb[0].mxu0 %v596
        %v664 = vpop.f32.mrb[0].mxu0
        %v665 = vadd.f32 0.0, %v664
        %v666 = vpop.f32.mrb[0].mxu0
        %667 = vdwg.mxu0
        %668 = vrot.lane.b32.xlu0 %v452, 116
        %v669 = vpop.permute.xlu0 %668
        %671 = vrot.lane.b32.xlu0 %v441, 124
        %v672 = vpop.permute.xlu0 %671
        %v674 = vsel %vm461, %v669, %v672
        %675 = vrot.lane.b32.xlu0 %v444, 8
        %v676 = vpop.permute.xlu0 %675
        %v678 = vmul.f32 %v441, %v676
        %v679 = vmul.f32 %v674, %v445
        %681 = vrot.lane.b32.xlu0 %v679, 8
        %v682 = vpop.permute.xlu0 %681
        %v684 = vadd.f32 %v678, %v682
        %v685 = vmul.f32 %v684, 0.35355338
        %687 = vrot.lane.b32.xlu0 %v685, 120
        %v688 = vpop.permute.xlu0 %687
        %v689 = vsel %vm505, %v688, 0
        %691 = vmatprep.subr.mxu0 0.0
        %692 = vmatpush1.xpose.msra.mxu0 %v509
        %693 = vmatprep.subr.mxu0 0.0
        %694 = vmatpush1.xpose.msra.mxu0 0.0
        %695 = vmatprep.subr.mxu0 0.0
        %696 = vmatpush1.xpose.msra.mxu0 0.0
        %697 = vmatprep.subr.mxu0 0.0
        %698 = vmatpush1.xpose.msra.mxu0 0.0
        %699 = vmatprep.subr.mxu0 0.0
        %700 = vmatpush1.xpose.msra.mxu0 0.0
        %701 = vmatprep.subr.mxu0 0.0
        %702 = vmatpush1.xpose.msra.mxu0 0.0
        %703 = vmatprep.subr.mxu0 0.0
        %704 = vmatpush1.xpose.msra.mxu0 0.0
        %705 = vmatprep.subr.mxu0 0.0
        %706 = vmatpush1.xpose.msra.mxu0 0.0
        %707 = vmatprep.subr.mxu0 0.0
        %708 = vmatpush1.xpose.msra.mxu0 0.0
        %709 = vmatprep.subr.mxu0 0.0
        %710 = vmatpush1.xpose.msra.mxu0 0.0
        %711 = vmatprep.subr.mxu0 0.0
        %712 = vmatpush1.xpose.msra.mxu0 0.0
        %713 = vmatprep.subr.mxu0 0.0
        %714 = vmatpush1.xpose.msra.mxu0 0.0
        %715 = vmatprep.subr.mxu0 0.0
        %716 = vmatpush1.xpose.msra.mxu0 0.0
        %717 = vmatprep.subr.mxu0 0.0
        %718 = vmatpush1.xpose.msra.mxu0 0.0
        %719 = vmatprep.subr.mxu0 0.0
        %720 = vmatpush1.xpose.msra.mxu0 0.0
        %721 = vmatprep.subr.mxu0 0.0
        %722 = vmatpush1.xpose.msra.mxu0 0.0
        %723 = vmatprep.subr.mxu0 0.0
        %724 = vmatpush1.xpose.msra.mxu0 0.0
        %725 = vmatprep.subr.mxu0 0.0
        %726 = vmatpush1.xpose.msra.mxu0 0.0
        %727 = vmatprep.subr.mxu0 0.0
        %728 = vmatpush1.xpose.msra.mxu0 0.0
        %729 = vmatprep.subr.mxu0 0.0
        %730 = vmatpush1.xpose.msra.mxu0 0.0
        %731 = vmatprep.subr.mxu0 0.0
        %732 = vmatpush1.xpose.msra.mxu0 0.0
        %733 = vmatprep.subr.mxu0 0.0
        %734 = vmatpush1.xpose.msra.mxu0 0.0
        %735 = vmatprep.subr.mxu0 0.0
        %736 = vmatpush1.xpose.msra.mxu0 0.0
        %737 = vmatprep.subr.mxu0 0.0
        %738 = vmatpush1.xpose.msra.mxu0 0.0
        %739 = vmatprep.subr.mxu0 0.0
        %740 = vmatpush1.xpose.msra.mxu0 0.0
        %741 = vmatprep.subr.mxu0 0.0
        %742 = vmatpush1.xpose.msra.mxu0 0.0
        %743 = vmatprep.subr.mxu0 0.0
        %744 = vmatpush1.xpose.msra.mxu0 0.0
        %745 = vmatprep.subr.mxu0 0.0
        %746 = vmatpush1.xpose.msra.mxu0 0.0
        %747 = vmatprep.subr.mxu0 0.0
        %748 = vmatpush1.xpose.msra.mxu0 0.0
        %749 = vmatprep.subr.mxu0 0.0
        %750 = vmatpush1.xpose.msra.mxu0 0.0
        %751 = vmatprep.subr.mxu0 0.0
        %752 = vmatpush1.xpose.msra.mxu0 0.0
        %753 = vmatprep.subr.mxu0 0.0
        %754 = vmatpush1.xpose.msra.mxu0 0.0
        %755 = vmatprep.mubr.f32.mxu0 0.0
        %756 = vmatmul.mubr.f32.gmra.mrb[0].mxu0 %v689
        %v757 = vpop.f32.mrb[0].mxu0
        %v758 = vadd.f32 %v451, %v757
        %v759 = vpop.f32.mrb[0].mxu0
        %760 = vdwg.mxu0
        %v761 = vsel %vm505, %v758, -inf
        %762 = vmax.xlane.f32.xlu0 %v761
        %v763 = vpop.xlane.xlu0 %762
        %v764 = vsub.f32 %v758, %v763
        %v765 = vmul.f32 %v764, 1.442695
        %v766 = vpow.pop %v765
        %v767 = vsel %vm505, %v766, 0.0
        %768 = vadd.xlane.f32.xlu0 %v767
        %v769 = vpop.xlane.xlu0 %768
        %v770 = vrcp.pop %v769
        %v771 = vmul.f32 %v766, %v770
        %v773 = vsel %vm505, %v771, 0
        %775 = vmatprep.subr.mxu0 0.0
        %776 = vmatpush1.msra.mxu0 %v593
        %777 = vmatprep.subr.mxu0 0.0
        %778 = vmatpush1.msra.mxu0 0.0
        %779 = vmatprep.subr.mxu0 0.0
        %780 = vmatpush1.msra.mxu0 0.0
        %781 = vmatprep.subr.mxu0 0.0
        %782 = vmatpush1.msra.mxu0 0.0
        %783 = vmatprep.subr.mxu0 0.0
        %784 = vmatpush1.msra.mxu0 0.0
        %785 = vmatprep.subr.mxu0 0.0
        %786 = vmatpush1.msra.mxu0 0.0
        %787 = vmatprep.subr.mxu0 0.0
        %788 = vmatpush1.msra.mxu0 0.0
        %789 = vmatprep.subr.mxu0 0.0
        %790 = vmatpush1.msra.mxu0 0.0
        %791 = vmatprep.subr.mxu0 0.0
        %792 = vmatpush1.msra.mxu0 0.0
        %793 = vmatprep.subr.mxu0 0.0
        %794 = vmatpush1.msra.mxu0 0.0
        %795 = vmatprep.subr.mxu0 0.0
        %796 = vmatpush1.msra.mxu0 0.0
        %797 = vmatprep.subr.mxu0 0.0
        %798 = vmatpush1.msra.mxu0 0.0
        %799 = vmatprep.subr.mxu0 0.0
        %800 = vmatpush1.msra.mxu0 0.0
        %801 = vmatprep.subr.mxu0 0.0
        %802 = vmatpush1.msra.mxu0 0.0
        %803 = vmatprep.subr.mxu0 0.0
        %804 = vmatpush1.msra.mxu0 0.0
        %805 = vmatprep.subr.mxu0 0.0
        %806 = vmatpush1.msra.mxu0 0.0
        %807 = vmatprep.subr.mxu0 0.0
        %808 = vmatpush1.msra.mxu0 0.0
        %809 = vmatprep.subr.mxu0 0.0
        %810 = vmatpush1.msra.mxu0 0.0
        %811 = vmatprep.subr.mxu0 0.0
        %812 = vmatpush1.msra.mxu0 0.0
        %813 = vmatprep.subr.mxu0 0.0
        %814 = vmatpush1.msra.mxu0 0.0
        %815 = vmatprep.subr.mxu0 0.0
        %816 = vmatpush1.msra.mxu0 0.0
        %817 = vmatprep.subr.mxu0 0.0
        %818 = vmatpush1.msra.mxu0 0.0
        %819 = vmatprep.subr.mxu0 0.0
        %820 = vmatpush1.msra.mxu0 0.0
        %821 = vmatprep.subr.mxu0 0.0
        %822 = vmatpush1.msra.mxu0 0.0
        %823 = vmatprep.subr.mxu0 0.0
        %824 = vmatpush1.msra.mxu0 0.0
        %825 = vmatprep.subr.mxu0 0.0
        %826 = vmatpush1.msra.mxu0 0.0
        %827 = vmatprep.subr.mxu0 0.0
        %828 = vmatpush1.msra.mxu0 0.0
        %829 = vmatprep.subr.mxu0 0.0
        %830 = vmatpush1.msra.mxu0 0.0
        %831 = vmatprep.subr.mxu0 0.0
        %832 = vmatpush1.msra.mxu0 0.0
        %833 = vmatprep.subr.mxu0 0.0
        %834 = vmatpush1.msra.mxu0 0.0
        %835 = vmatprep.subr.mxu0 0.0
        %836 = vmatpush1.msra.mxu0 0.0
        %837 = vmatprep.subr.mxu0 0.0
        %838 = vmatpush1.msra.mxu0 0.0
        %839 = vmatprep.mubr.f32.mxu0 0.0
        %840 = vmatmul.mubr.f32.gmra.mrb[0].mxu0 %v773
        %v841 = vpop.f32.mrb[0].mxu0
        %v842 = vadd.f32 0.0, %v841
        %v843 = vpop.f32.mrb[0].mxu0
        %844 = vdwg.mxu0
        %845 = vrot.lane.b32.xlu0 %v452, 108
        %v846 = vpop.permute.xlu0 %845
        %848 = vrot.lane.b32.xlu0 %v441, 116
        %v849 = vpop.permute.xlu0 %848
        %v851 = vsel %vm461, %v846, %v849
        %852 = vrot.lane.b32.xlu0 %v444, 16
        %v853 = vpop.permute.xlu0 %852
        %v855 = vmul.f32 %v441, %v853
        %v856 = vmul.f32 %v851, %v445
        %858 = vrot.lane.b32.xlu0 %v856, 16
        %v859 = vpop.permute.xlu0 %858
        %v861 = vadd.f32 %v855, %v859
        %v862 = vmul.f32 %v861, 0.35355338
        %864 = vrot.lane.b32.xlu0 %v862, 112
        %v865 = vpop.permute.xlu0 %864
        %867 = vrot.lane.b32.xlu0 %v490, 88
        %v868 = vpop.permute.xlu0 %867
        %v869 = vsel %vm505, %v865, 0
        %v871 = vsel %vm505, %v868, 0
        %873 = vmatprep.subr.mxu0 0.0
        %874 = vmatpush1.xpose.msra.mxu0 %v871
        %875 = vmatprep.subr.mxu0 0.0
        %876 = vmatpush1.xpose.msra.mxu0 0.0
        %877 = vmatprep.subr.mxu0 0.0
        %878 = vmatpush1.xpose.msra.mxu0 0.0
        %879 = vmatprep.subr.mxu0 0.0
        %880 = vmatpush1.xpose.msra.mxu0 0.0
        %881 = vmatprep.subr.mxu0 0.0
        %882 = vmatpush1.xpose.msra.mxu0 0.0
        %883 = vmatprep.subr.mxu0 0.0
        %884 = vmatpush1.xpose.msra.mxu0 0.0
        %885 = vmatprep.subr.mxu0 0.0
        %886 = vmatpush1.xpose.msra.mxu0 0.0
        %887 = vmatprep.subr.mxu0 0.0
        %888 = vmatpush1.xpose.msra.mxu0 0.0
        %889 = vmatprep.subr.mxu0 0.0
        %890 = vmatpush1.xpose.msra.mxu0 0.0
        %891 = vmatprep.subr.mxu0 0.0
        %892 = vmatpush1.xpose.msra.mxu0 0.0
        %893 = vmatprep.subr.mxu0 0.0
        %894 = vmatpush1.xpose.msra.mxu0 0.0
        %895 = vmatprep.subr.mxu0 0.0
        %896 = vmatpush1.xpose.msra.mxu0 0.0
        %897 = vmatprep.subr.mxu0 0.0
        %898 = vmatpush1.xpose.msra.mxu0 0.0
        %899 = vmatprep.subr.mxu0 0.0
        %900 = vmatpush1.xpose.msra.mxu0 0.0
        %901 = vmatprep.subr.mxu0 0.0
        %902 = vmatpush1.xpose.msra.mxu0 0.0
        %903 = vmatprep.subr.mxu0 0.0
        %904 = vmatpush1.xpose.msra.mxu0 0.0
        %905 = vmatprep.subr.mxu0 0.0
        %906 = vmatpush1.xpose.msra.mxu0 0.0
        %907 = vmatprep.subr.mxu0 0.0
        %908 = vmatpush1.xpose.msra.mxu0 0.0
        %909 = vmatprep.subr.mxu0 0.0
        %910 = vmatpush1.xpose.msra.mxu0 0.0
        %911 = vmatprep.subr.mxu0 0.0
        %912 = vmatpush1.xpose.msra.mxu0 0.0
        %913 = vmatprep.subr.mxu0 0.0
        %914 = vmatpush1.xpose.msra.mxu0 0.0
        %915 = vmatprep.subr.mxu0 0.0
        %916 = vmatpush1.xpose.msra.mxu0 0.0
        %917 = vmatprep.subr.mxu0 0.0
        %918 = vmatpush1.xpose.msra.mxu0 0.0
        %919 = vmatprep.subr.mxu0 0.0
        %920 = vmatpush1.xpose.msra.mxu0 0.0
        %921 = vmatprep.subr.mxu0 0.0
        %922 = vmatpush1.xpose.msra.mxu0 0.0
        %923 = vmatprep.subr.mxu0 0.0
        %924 = vmatpush1.xpose.msra.mxu0 0.0
        %925 = vmatprep.subr.mxu0 0.0
        %926 = vmatpush1.xpose.msra.mxu0 0.0
        %927 = vmatprep.subr.mxu0 0.0
        %928 = vmatpush1.xpose.msra.mxu0 0.0
        %929 = vmatprep.subr.mxu0 0.0
        %930 = vmatpush1.xpose.msra.mxu0 0.0
        %931 = vmatprep.subr.mxu0 0.0
        %932 = vmatpush1.xpose.msra.mxu0 0.0
        %933 = vmatprep.subr.mxu0 0.0
        %934 = vmatpush1.xpose.msra.mxu0 0.0
        %935 = vmatprep.subr.mxu0 0.0
        %936 = vmatpush1.xpose.msra.mxu0 0.0
        %937 = vmatprep.mubr.f32.mxu0 0.0
        %938 = vmatmul.mubr.f32.gmra.mrb[0].mxu0 %v869
        %v939 = vpop.f32.mrb[0].mxu0
        %v940 = vadd.f32 %v451, %v939
        %v941 = vpop.f32.mrb[0].mxu0
        %942 = vdwg.mxu0
        %v943 = vsel %vm505, %v940, -inf
        %944 = vmax.xlane.f32.xlu0 %v943
        %v945 = vpop.xlane.xlu0 %944
        %v946 = vsub.f32 %v940, %v945
        %v947 = vmul.f32 %v946, 1.442695
        %v948 = vpow.pop %v947
        %v949 = vsel %vm505, %v948, 0.0
        %950 = vadd.xlane.f32.xlu0 %v949
        %v951 = vpop.xlane.xlu0 %950
        %v952 = vrcp.pop %v951
        %v953 = vmul.f32 %v948, %v952
        %954 = vrot.lane.b32.xlu0 %v441, 72
        %v955 = vpop.permute.xlu0 %954
        %v958 = vsel %vm505, %v953, 0
        %960 = vmatprep.subr.mxu0 0.0
        %961 = vmatpush1.msra.mxu0 %v955
        %962 = vmatprep.subr.mxu0 0.0
        %963 = vmatpush1.msra.mxu0 0.0
        %964 = vmatprep.subr.mxu0 0.0
        %965 = vmatpush1.msra.mxu0 0.0
        %966 = vmatprep.subr.mxu0 0.0
        %967 = vmatpush1.msra.mxu0 0.0
        %968 = vmatprep.subr.mxu0 0.0
        %969 = vmatpush1.msra.mxu0 0.0
        %970 = vmatprep.subr.mxu0 0.0
        %971 = vmatpush1.msra.mxu0 0.0
        %972 = vmatprep.subr.mxu0 0.0
        %973 = vmatpush1.msra.mxu0 0.0
        %974 = vmatprep.subr.mxu0 0.0
        %975 = vmatpush1.msra.mxu0 0.0
        %976 = vmatprep.subr.mxu0 0.0
        %977 = vmatpush1.msra.mxu0 0.0
        %978 = vmatprep.subr.mxu0 0.0
        %979 = vmatpush1.msra.mxu0 0.0
        %980 = vmatprep.subr.mxu0 0.0
        %981 = vmatpush1.msra.mxu0 0.0
        %982 = vmatprep.subr.mxu0 0.0
        %983 = vmatpush1.msra.mxu0 0.0
        %984 = vmatprep.subr.mxu0 0.0
        %985 = vmatpush1.msra.mxu0 0.0
        %986 = vmatprep.subr.mxu0 0.0
        %987 = vmatpush1.msra.mxu0 0.0
        %988 = vmatprep.subr.mxu0 0.0
        %989 = vmatpush1.msra.mxu0 0.0
        %990 = vmatprep.subr.mxu0 0.0
        %991 = vmatpush1.msra.mxu0 0.0
        %992 = vmatprep.subr.mxu0 0.0
        %993 = vmatpush1.msra.mxu0 0.0
        %994 = vmatprep.subr.mxu0 0.0
        %995 = vmatpush1.msra.mxu0 0.0
        %996 = vmatprep.subr.mxu0 0.0
        %997 = vmatpush1.msra.mxu0 0.0
        %998 = vmatprep.subr.mxu0 0.0
        %999 = vmatpush1.msra.mxu0 0.0
        %1000 = vmatprep.subr.mxu0 0.0
        %1001 = vmatpush1.msra.mxu0 0.0
        %1002 = vmatprep.subr.mxu0 0.0
        %1003 = vmatpush1.msra.mxu0 0.0
        %1004 = vmatprep.subr.mxu0 0.0
        %1005 = vmatpush1.msra.mxu0 0.0
        %1006 = vmatprep.subr.mxu0 0.0
        %1007 = vmatpush1.msra.mxu0 0.0
        %1008 = vmatprep.subr.mxu0 0.0
        %1009 = vmatpush1.msra.mxu0 0.0
        %1010 = vmatprep.subr.mxu0 0.0
        %1011 = vmatpush1.msra.mxu0 0.0
        %1012 = vmatprep.subr.mxu0 0.0
        %1013 = vmatpush1.msra.mxu0 0.0
        %1014 = vmatprep.subr.mxu0 0.0
        %1015 = vmatpush1.msra.mxu0 0.0
        %1016 = vmatprep.subr.mxu0 0.0
        %1017 = vmatpush1.msra.mxu0 0.0
        %1018 = vmatprep.subr.mxu0 0.0
        %1019 = vmatpush1.msra.mxu0 0.0
        %1020 = vmatprep.subr.mxu0 0.0
        %1021 = vmatpush1.msra.mxu0 0.0
        %1022 = vmatprep.subr.mxu0 0.0
        %1023 = vmatpush1.msra.mxu0 0.0
        %1024 = vmatprep.mubr.f32.mxu0 0.0
        %1025 = vmatmul.mubr.f32.gmra.mrb[0].mxu0 %v958
        %v1026 = vpop.f32.mrb[0].mxu0
        %v1027 = vadd.f32 0.0, %v1026
        %v1028 = vpop.f32.mrb[0].mxu0
        %1029 = vdwg.mxu0
        %1030 = vrot.lane.b32.xlu0 %v452, 100
        %v1031 = vpop.permute.xlu0 %1030
        %1033 = vrot.lane.b32.xlu0 %v441, 108
        %v1034 = vpop.permute.xlu0 %1033
        %v1036 = vsel %vm461, %v1031, %v1034
        %1037 = vrot.lane.b32.xlu0 %v444, 24
        %v1038 = vpop.permute.xlu0 %1037
        %v1040 = vmul.f32 %v441, %v1038
        %v1041 = vmul.f32 %v1036, %v445
        %1043 = vrot.lane.b32.xlu0 %v1041, 24
        %v1044 = vpop.permute.xlu0 %1043
        %v1046 = vadd.f32 %v1040, %v1044
        %v1047 = vmul.f32 %v1046, 0.35355338
        %1049 = vrot.lane.b32.xlu0 %v1047, 104
        %v1050 = vpop.permute.xlu0 %1049
        %v1051 = vsel %vm505, %v1050, 0
        %1053 = vmatprep.subr.mxu0 0.0
        %1054 = vmatpush1.xpose.msra.mxu0 %v871
        %1055 = vmatprep.subr.mxu0 0.0
        %1056 = vmatpush1.xpose.msra.mxu0 0.0
        %1057 = vmatprep.subr.mxu0 0.0
        %1058 = vmatpush1.xpose.msra.mxu0 0.0
        %1059 = vmatprep.subr.mxu0 0.0
        %1060 = vmatpush1.xpose.msra.mxu0 0.0
        %1061 = vmatprep.subr.mxu0 0.0
        %1062 = vmatpush1.xpose.msra.mxu0 0.0
        %1063 = vmatprep.subr.mxu0 0.0
        %1064 = vmatpush1.xpose.msra.mxu0 0.0
        %1065 = vmatprep.subr.mxu0 0.0
        %1066 = vmatpush1.xpose.msra.mxu0 0.0
        %1067 = vmatprep.subr.mxu0 0.0
        %1068 = vmatpush1.xpose.msra.mxu0 0.0
        %1069 = vmatprep.subr.mxu0 0.0
        %1070 = vmatpush1.xpose.msra.mxu0 0.0
        %1071 = vmatprep.subr.mxu0 0.0
        %1072 = vmatpush1.xpose.msra.mxu0 0.0
        %1073 = vmatprep.subr.mxu0 0.0
        %1074 = vmatpush1.xpose.msra.mxu0 0.0
        %1075 = vmatprep.subr.mxu0 0.0
        %1076 = vmatpush1.xpose.msra.mxu0 0.0
        %1077 = vmatprep.subr.mxu0 0.0
        %1078 = vmatpush1.xpose.msra.mxu0 0.0
        %1079 = vmatprep.subr.mxu0 0.0
        %1080 = vmatpush1.xpose.msra.mxu0 0.0
        %1081 = vmatprep.subr.mxu0 0.0
        %1082 = vmatpush1.xpose.msra.mxu0 0.0
        %1083 = vmatprep.subr.mxu0 0.0
        %1084 = vmatpush1.xpose.msra.mxu0 0.0
        %1085 = vmatprep.subr.mxu0 0.0
        %1086 = vmatpush1.xpose.msra.mxu0 0.0
        %1087 = vmatprep.subr.mxu0 0.0
        %1088 = vmatpush1.xpose.msra.mxu0 0.0
        %1089 = vmatprep.subr.mxu0 0.0
        %1090 = vmatpush1.xpose.msra.mxu0 0.0
        %1091 = vmatprep.subr.mxu0 0.0
        %1092 = vmatpush1.xpose.msra.mxu0 0.0
        %1093 = vmatprep.subr.mxu0 0.0
        %1094 = vmatpush1.xpose.msra.mxu0 0.0
        %1095 = vmatprep.subr.mxu0 0.0
        %1096 = vmatpush1.xpose.msra.mxu0 0.0
        %1097 = vmatprep.subr.mxu0 0.0
        %1098 = vmatpush1.xpose.msra.mxu0 0.0
        %1099 = vmatprep.subr.mxu0 0.0
        %1100 = vmatpush1.xpose.msra.mxu0 0.0
        %1101 = vmatprep.subr.mxu0 0.0
        %1102 = vmatpush1.xpose.msra.mxu0 0.0
        %1103 = vmatprep.subr.mxu0 0.0
        %1104 = vmatpush1.xpose.msra.mxu0 0.0
        %1105 = vmatprep.subr.mxu0 0.0
        %1106 = vmatpush1.xpose.msra.mxu0 0.0
        %1107 = vmatprep.subr.mxu0 0.0
        %1108 = vmatpush1.xpose.msra.mxu0 0.0
        %1109 = vmatprep.subr.mxu0 0.0
        %1110 = vmatpush1.xpose.msra.mxu0 0.0
        %1111 = vmatprep.subr.mxu0 0.0
        %1112 = vmatpush1.xpose.msra.mxu0 0.0
        %1113 = vmatprep.subr.mxu0 0.0
        %1114 = vmatpush1.xpose.msra.mxu0 0.0
        %1115 = vmatprep.subr.mxu0 0.0
        %1116 = vmatpush1.xpose.msra.mxu0 0.0
        %1117 = vmatprep.mubr.f32.mxu0 0.0
        %1118 = vmatmul.mubr.f32.gmra.mrb[0].mxu0 %v1051
        %v1119 = vpop.f32.mrb[0].mxu0
        %v1120 = vadd.f32 %v451, %v1119
        %v1121 = vpop.f32.mrb[0].mxu0
        %1122 = vdwg.mxu0
        %v1123 = vsel %vm505, %v1120, -inf
        %1124 = vmax.xlane.f32.xlu0 %v1123
        %v1125 = vpop.xlane.xlu0 %1124
        %v1126 = vsub.f32 %v1120, %v1125
        %v1127 = vmul.f32 %v1126, 1.442695
        %v1128 = vpow.pop %v1127
        %v1129 = vsel %vm505, %v1128, 0.0
        %1130 = vadd.xlane.f32.xlu0 %v1129
        %v1131 = vpop.xlane.xlu0 %1130
        %v1132 = vrcp.pop %v1131
        %v1133 = vmul.f32 %v1128, %v1132
        %v1135 = vsel %vm505, %v1133, 0
        %1137 = vmatprep.subr.mxu0 0.0
        %1138 = vmatpush1.msra.mxu0 %v955
        %1139 = vmatprep.subr.mxu0 0.0
        %1140 = vmatpush1.msra.mxu0 0.0
        %1141 = vmatprep.subr.mxu0 0.0
        %1142 = vmatpush1.msra.mxu0 0.0
        %1143 = vmatprep.subr.mxu0 0.0
        %1144 = vmatpush1.msra.mxu0 0.0
        %1145 = vmatprep.subr.mxu0 0.0
        %1146 = vmatpush1.msra.mxu0 0.0
        %1147 = vmatprep.subr.mxu0 0.0
        %1148 = vmatpush1.msra.mxu0 0.0
        %1149 = vmatprep.subr.mxu0 0.0
        %1150 = vmatpush1.msra.mxu0 0.0
        %1151 = vmatprep.subr.mxu0 0.0
        %1152 = vmatpush1.msra.mxu0 0.0
        %1153 = vmatprep.subr.mxu0 0.0
        %1154 = vmatpush1.msra.mxu0 0.0
        %1155 = vmatprep.subr.mxu0 0.0
        %1156 = vmatpush1.msra.mxu0 0.0
        %1157 = vmatprep.subr.mxu0 0.0
        %1158 = vmatpush1.msra.mxu0 0.0
        %1159 = vmatprep.subr.mxu0 0.0
        %1160 = vmatpush1.msra.mxu0 0.0
        %1161 = vmatprep.subr.mxu0 0.0
        %1162 = vmatpush1.msra.mxu0 0.0
        %1163 = vmatprep.subr.mxu0 0.0
        %1164 = vmatpush1.msra.mxu0 0.0
        %1165 = vmatprep.subr.mxu0 0.0
        %1166 = vmatpush1.msra.mxu0 0.0
        %1167 = vmatprep.subr.mxu0 0.0
        %1168 = vmatpush1.msra.mxu0 0.0
        %1169 = vmatprep.subr.mxu0 0.0
        %1170 = vmatpush1.msra.mxu0 0.0
        %1171 = vmatprep.subr.mxu0 0.0
        %1172 = vmatpush1.msra.mxu0 0.0
        %1173 = vmatprep.subr.mxu0 0.0
        %1174 = vmatpush1.msra.mxu0 0.0
        %1175 = vmatprep.subr.mxu0 0.0
        %1176 = vmatpush1.msra.mxu0 0.0
        %1177 = vmatprep.subr.mxu0 0.0
        %1178 = vmatpush1.msra.mxu0 0.0
        %1179 = vmatprep.subr.mxu0 0.0
        %1180 = vmatpush1.msra.mxu0 0.0
        %1181 = vmatprep.subr.mxu0 0.0
        %1182 = vmatpush1.msra.mxu0 0.0
        %1183 = vmatprep.subr.mxu0 0.0
        %1184 = vmatpush1.msra.mxu0 0.0
        %1185 = vmatprep.subr.mxu0 0.0
        %1186 = vmatpush1.msra.mxu0 0.0
        %1187 = vmatprep.subr.mxu0 0.0
        %1188 = vmatpush1.msra.mxu0 0.0
        %1189 = vmatprep.subr.mxu0 0.0
        %1190 = vmatpush1.msra.mxu0 0.0
        %1191 = vmatprep.subr.mxu0 0.0
        %1192 = vmatpush1.msra.mxu0 0.0
        %1193 = vmatprep.subr.mxu0 0.0
        %1194 = vmatpush1.msra.mxu0 0.0
        %1195 = vmatprep.subr.mxu0 0.0
        %1196 = vmatpush1.msra.mxu0 0.0
        %1197 = vmatprep.subr.mxu0 0.0
        %1198 = vmatpush1.msra.mxu0 0.0
        %1199 = vmatprep.subr.mxu0 0.0
        %1200 = vmatpush1.msra.mxu0 0.0
        %1201 = vmatprep.mubr.f32.mxu0 0.0
        %1202 = vmatmul.mubr.f32.gmra.mrb[0].mxu0 %v1135
        %v1203 = vpop.f32.mrb[0].mxu0
        %v1204 = vadd.f32 0.0, %v1203
        %v1205 = vpop.f32.mrb[0].mxu0
        %1206 = vdwg.mxu0
        %1208 = vrot.lane.b32.xlu0 %v842, 8
        %v1209 = vpop.permute.xlu0 %1208
        %1212 = vrot.lane.b32.xlu0 %v1027, 16
        %v1213 = vpop.permute.xlu0 %1212
        %1216 = vrot.lane.b32.xlu0 %v1204, 24
        %v1217 = vpop.permute.xlu0 %1216
        %v1219 = vsel %vm505, %v665, %v1209
        %vm1220 = vcmask 130048
        %v1221 = vsel %vm1220, %v1219, %v1213
        %vm1222 = vcmask 195584
        %v1223 = vsel %vm1222, %v1221, %v1217
        %v1224 = vld [vmem:[%s2] sm:$0xff]
        %v1225 = vld [vmem:[%s2 + $0x8] sm:$0xff]
        %v1226 = vld [vmem:[%s2 + $0x10] sm:$0xff]
        %v1227 = vld [vmem:[%s2 + $0x18] sm:$0xff]
        %v1229 = vsel %vm350, %v1223, 0
        %1231 = vmatprep.subr.mxu0 0.0
        %1232 = vmatpush1.msra.mxu0 %v1224
        %1233 = vmatprep.subr.mxu0 0.0
        %1234 = vmatpush1.msra.mxu0 %v1225
        %1235 = vmatprep.subr.mxu0 0.0
        %1236 = vmatpush1.msra.mxu0 %v1226
        %1237 = vmatprep.subr.mxu0 0.0
        %1238 = vmatpush1.msra.mxu0 %v1227
        %1239 = vmatprep.subr.mxu0 0.0
        %1240 = vmatpush1.msra.mxu0 0.0
        %1241 = vmatprep.subr.mxu0 0.0
        %1242 = vmatpush1.msra.mxu0 0.0
        %1243 = vmatprep.subr.mxu0 0.0
        %1244 = vmatpush1.msra.mxu0 0.0
        %1245 = vmatprep.subr.mxu0 0.0
        %1246 = vmatpush1.msra.mxu0 0.0
        %1247 = vmatprep.subr.mxu0 0.0
        %1248 = vmatpush1.msra.mxu0 0.0
        %1249 = vmatprep.subr.mxu0 0.0
        %1250 = vmatpush1.msra.mxu0 0.0
        %1251 = vmatprep.subr.mxu0 0.0
        %1252 = vmatpush1.msra.mxu0 0.0
        %1253 = vmatprep.subr.mxu0 0.0
        %1254 = vmatpush1.msra.mxu0 0.0
        %1255 = vmatprep.subr.mxu0 0.0
        %1256 = vmatpush1.msra.mxu0 0.0
        %1257 = vmatprep.subr.mxu0 0.0
        %1258 = vmatpush1.msra.mxu0 0.0
        %1259 = vmatprep.subr.mxu0 0.0
        %1260 = vmatpush1.msra.mxu0 0.0
        %1261 = vmatprep.subr.mxu0 0.0
        %1262 = vmatpush1.msra.mxu0 0.0
        %1263 = vmatprep.subr.mxu0 0.0
        %1264 = vmatpush1.msra.mxu0 0.0
        %1265 = vmatprep.subr.mxu0 0.0
        %1266 = vmatpush1.msra.mxu0 0.0
        %1267 = vmatprep.subr.mxu0 0.0
        %1268 = vmatpush1.msra.mxu0 0.0
        %1269 = vmatprep.subr.mxu0 0.0
        %1270 = vmatpush1.msra.mxu0 0.0
        %1271 = vmatprep.subr.mxu0 0.0
        %1272 = vmatpush1.msra.mxu0 0.0
        %1273 = vmatprep.subr.mxu0 0.0
        %1274 = vmatpush1.msra.mxu0 0.0
        %1275 = vmatprep.subr.mxu0 0.0
        %1276 = vmatpush1.msra.mxu0 0.0
        %1277 = vmatprep.subr.mxu0 0.0
        %1278 = vmatpush1.msra.mxu0 0.0
        %1279 = vmatprep.subr.mxu0 0.0
        %1280 = vmatpush1.msra.mxu0 0.0
        %1281 = vmatprep.subr.mxu0 0.0
        %1282 = vmatpush1.msra.mxu0 0.0
        %1283 = vmatprep.subr.mxu0 0.0
        %1284 = vmatpush1.msra.mxu0 0.0
        %1285 = vmatprep.subr.mxu0 0.0
        %1286 = vmatpush1.msra.mxu0 0.0
        %1287 = vmatprep.subr.mxu0 0.0
        %1288 = vmatpush1.msra.mxu0 0.0
        %1289 = vmatprep.subr.mxu0 0.0
        %1290 = vmatpush1.msra.mxu0 0.0
        %1291 = vmatprep.subr.mxu0 0.0
        %1292 = vmatpush1.msra.mxu0 0.0
        %1293 = vmatprep.subr.mxu0 0.0
        %1294 = vmatpush1.msra.mxu0 0.0
        %1295 = vmatprep.mubr.f32.mxu0 0.0
        %1296 = vmatmul.mubr.f32.gmra.mrb[0].mxu0 %v1229
        %v1297 = vpop.f32.mrb[0].mxu0
        %v1298 = vadd.f32 0.0, %v1297
        %v1299 = vpop.f32.mrb[0].mxu0
        %1300 = vdwg.mxu0
        %v1301 = vadd.f32 %v348, %v1298
        %v1302 = vmul.f32 %v1301, %v1301
        %v1303 = vsel %vm350, %v1302, 0.0
        %1304 = vadd.xlane.f32.xlu0 %v1303
        %v1305 = vpop.xlane.xlu0 %1304
        %v1306 = vmul.f32 %v1305, %v354
        %v1307 = vadd.f32 %v1306, 1e-05
        %v1308 = vrsqrt.pop %v1307
        %v1309 = vmul.f32 %v1301, %v1308
        %v1310 = vld [vmem:[%s6] sm:$0x1]
        %v1312 = vlaneseq
        %v1313 = vshrl.u32 %v1312, 7
        %v1314 = vsub.s32 0, %v1313
        %v1315 = vrot.slane %v1310, %v1314
        %v1317 = vmul.f32 %v1309, %v1315
        %v1318 = vld [vmem:[%s3] sm:$0xff]
        %v1319 = vld [vmem:[%s3 + $0x8] sm:$0xff]
        %v1320 = vld [vmem:[%s3 + $0x10] sm:$0xff]
        %v1321 = vld [vmem:[%s3 + $0x18] sm:$0xff]
        %v1323 = vsel %vm350, %v1317, 0
        %1325 = vmatprep.subr.mxu0 0.0
        %1326 = vmatpush1.msra.mxu0 %v1318
        %1327 = vmatprep.subr.mxu0 0.0
        %1328 = vmatpush1.msra.mxu0 %v1319
        %1329 = vmatprep.subr.mxu0 0.0
        %1330 = vmatpush1.msra.mxu0 %v1320
        %1331 = vmatprep.subr.mxu0 0.0
        %1332 = vmatpush1.msra.mxu0 %v1321
        %1333 = vmatprep.subr.mxu0 0.0
        %1334 = vmatpush1.msra.mxu0 0.0
        %1335 = vmatprep.subr.mxu0 0.0
        %1336 = vmatpush1.msra.mxu0 0.0
        %1337 = vmatprep.subr.mxu0 0.0
        %1338 = vmatpush1.msra.mxu0 0.0
        %1339 = vmatprep.subr.mxu0 0.0
        %1340 = vmatpush1.msra.mxu0 0.0
        %1341 = vmatprep.subr.mxu0 0.0
        %1342 = vmatpush1.msra.mxu0 0.0
        %1343 = vmatprep.subr.mxu0 0.0
        %1344 = vmatpush1.msra.mxu0 0.0
        %1345 = vmatprep.subr.mxu0 0.0
        %1346 = vmatpush1.msra.mxu0 0.0
        %1347 = vmatprep.subr.mxu0 0.0
        %1348 = vmatpush1.msra.mxu0 0.0
        %1349 = vmatprep.subr.mxu0 0.0
        %1350 = vmatpush1.msra.mxu0 0.0
        %1351 = vmatprep.subr.mxu0 0.0
        %1352 = vmatpush1.msra.mxu0 0.0
        %1353 = vmatprep.subr.mxu0 0.0
        %1354 = vmatpush1.msra.mxu0 0.0
        %1355 = vmatprep.subr.mxu0 0.0
        %1356 = vmatpush1.msra.mxu0 0.0
        %1357 = vmatprep.subr.mxu0 0.0
        %1358 = vmatpush1.msra.mxu0 0.0
        %1359 = vmatprep.subr.mxu0 0.0
        %1360 = vmatpush1.msra.mxu0 0.0
        %1361 = vmatprep.subr.mxu0 0.0
        %1362 = vmatpush1.msra.mxu0 0.0
        %1363 = vmatprep.subr.mxu0 0.0
        %1364 = vmatpush1.msra.mxu0 0.0
        %1365 = vmatprep.subr.mxu0 0.0
        %1366 = vmatpush1.msra.mxu0 0.0
        %1367 = vmatprep.subr.mxu0 0.0
        %1368 = vmatpush1.msra.mxu0 0.0
        %1369 = vmatprep.subr.mxu0 0.0
        %1370 = vmatpush1.msra.mxu0 0.0
        %1371 = vmatprep.subr.mxu0 0.0
        %1372 = vmatpush1.msra.mxu0 0.0
        %1373 = vmatprep.subr.mxu0 0.0
        %1374 = vmatpush1.msra.mxu0 0.0
        %1375 = vmatprep.subr.mxu0 0.0
        %1376 = vmatpush1.msra.mxu0 0.0
        %1377 = vmatprep.subr.mxu0 0.0
        %1378 = vmatpush1.msra.mxu0 0.0
        %1379 = vmatprep.subr.mxu0 0.0
        %1380 = vmatpush1.msra.mxu0 0.0
        %1381 = vmatprep.subr.mxu0 0.0
        %1382 = vmatpush1.msra.mxu0 0.0
        %1383 = vmatprep.subr.mxu0 0.0
        %1384 = vmatpush1.msra.mxu0 0.0
        %1385 = vmatprep.subr.mxu0 0.0
        %1386 = vmatpush1.msra.mxu0 0.0
        %1387 = vmatprep.subr.mxu0 0.0
        %1388 = vmatpush1.msra.mxu0 0.0
        %1389 = vmatprep.mubr.f32.mxu0 0.0
        %1390 = vmatmul.mubr.f32.gmra.mrb[0].mxu0 %v1323
        %v1391 = vpop.f32.mrb[0].mxu0
        %v1392 = vadd.f32 0.0, %v1391
        %v1393 = vpop.f32.mrb[0].mxu0
        %1394 = vdwg.mxu0
        %v1395 = vxor.u32 %v1392, 2147483648
        %v1396 = vmul.f32 %v1395, 1.442695
        %v1397 = vpow.pop %v1396
        %v1398 = vadd.f32 %v1397, 1.0
        %v1399 = vrcp.pop %v1398
        %v1400 = vmul.f32 1.0, %v1399
        %v1401 = vmul.f32 %v1392, %v1400
        %1403 = vrot.lane.b32.xlu0 %v1392, 64
        %v1404 = vpop.permute.xlu0 %1403
        %v1406 = vmul.f32 %v1401, %v1404
        %v1407 = vld [vmem:[%s4] sm:$0xff]
        %v1408 = vld [vmem:[%s4 + $0x8] sm:$0xff]
        %v1409 = vld [vmem:[%s4 + $0x10] sm:$0xff]
        %v1410 = vld [vmem:[%s4 + $0x18] sm:$0xff]
        %v1411 = vld [vmem:[%s4 + $0x20] sm:$0xff]
        %v1412 = vld [vmem:[%s4 + $0x28] sm:$0xff]
        %v1413 = vld [vmem:[%s4 + $0x30] sm:$0xff]
        %v1414 = vld [vmem:[%s4 + $0x38] sm:$0xff]
        %vm1415 = vcmask 523264
        %v1417 = vsel %vm1415, %v1406, 0
        %1419 = vmatprep.subr.mxu0 0.0
        %1420 = vmatpush1.msra.mxu0 %v1407
        %1421 = vmatprep.subr.mxu0 0.0
        %1422 = vmatpush1.msra.mxu0 %v1408
        %1423 = vmatprep.subr.mxu0 0.0
        %1424 = vmatpush1.msra.mxu0 %v1409
        %1425 = vmatprep.subr.mxu0 0.0
        %1426 = vmatpush1.msra.mxu0 %v1410
        %1427 = vmatprep.subr.mxu0 0.0
        %1428 = vmatpush1.msra.mxu0 %v1411
        %1429 = vmatprep.subr.mxu0 0.0
        %1430 = vmatpush1.msra.mxu0 %v1412
        %1431 = vmatprep.subr.mxu0 0.0
        %1432 = vmatpush1.msra.mxu0 %v1413
        %1433 = vmatprep.subr.mxu0 0.0
        %1434 = vmatpush1.msra.mxu0 %v1414
        %1435 = vmatprep.subr.mxu0 0.0
        %1436 = vmatpush1.msra.mxu0 0.0
        %1437 = vmatprep.subr.mxu0 0.0
        %1438 = vmatpush1.msra.mxu0 0.0
        %1439 = vmatprep.subr.mxu0 0.0
        %1440 = vmatpush1.msra.mxu0 0.0
        %1441 = vmatprep.subr.mxu0 0.0
        %1442 = vmatpush1.msra.mxu0 0.0
        %1443 = vmatprep.subr.mxu0 0.0
        %1444 = vmatpush1.msra.mxu0 0.0
        %1445 = vmatprep.subr.mxu0 0.0
        %1446 = vmatpush1.msra.mxu0 0.0
        %1447 = vmatprep.subr.mxu0 0.0
        %1448 = vmatpush1.msra.mxu0 0.0
        %1449 = vmatprep.subr.mxu0 0.0
        %1450 = vmatpush1.msra.mxu0 0.0
        %1451 = vmatprep.subr.mxu0 0.0
        %1452 = vmatpush1.msra.mxu0 0.0
        %1453 = vmatprep.subr.mxu0 0.0
        %1454 = vmatpush1.msra.mxu0 0.0
        %1455 = vmatprep.subr.mxu0 0.0
        %1456 = vmatpush1.msra.mxu0 0.0
        %1457 = vmatprep.subr.mxu0 0.0
        %1458 = vmatpush1.msra.mxu0 0.0
        %1459 = vmatprep.subr.mxu0 0.0
        %1460 = vmatpush1.msra.mxu0 0.0
        %1461 = vmatprep.subr.mxu0 0.0
        %1462 = vmatpush1.msra.mxu0 0.0
        %1463 = vmatprep.subr.mxu0 0.0
        %1464 = vmatpush1.msra.mxu0 0.0
        %1465 = vmatprep.subr.mxu0 0.0
        %1466 = vmatpush1.msra.mxu0 0.0
        %1467 = vmatprep.subr.mxu0 0.0
        %1468 = vmatpush1.msra.mxu0 0.0
        %1469 = vmatprep.subr.mxu0 0.0
        %1470 = vmatpush1.msra.mxu0 0.0
        %1471 = vmatprep.subr.mxu0 0.0
        %1472 = vmatpush1.msra.mxu0 0.0
        %1473 = vmatprep.subr.mxu0 0.0
        %1474 = vmatpush1.msra.mxu0 0.0
        %1475 = vmatprep.subr.mxu0 0.0
        %1476 = vmatpush1.msra.mxu0 0.0
        %1477 = vmatprep.subr.mxu0 0.0
        %1478 = vmatpush1.msra.mxu0 0.0
        %1479 = vmatprep.subr.mxu0 0.0
        %1480 = vmatpush1.msra.mxu0 0.0
        %1481 = vmatprep.subr.mxu0 0.0
        %1482 = vmatpush1.msra.mxu0 0.0
        %1483 = vmatprep.mubr.f32.mxu0 0.0
        %1484 = vmatmul.mubr.f32.gmra.mrb[0].mxu0 %v1417
        %v1485 = vpop.f32.mrb[0].mxu0
        %v1486 = vadd.f32 0.0, %v1485
        %v1487 = vpop.f32.mrb[0].mxu0
        %1488 = vdwg.mxu0
        %v1489 = vadd.f32 %v1301, %v1486
        %1490 = vst.msk [vmem:[%s347] sm:$0xff] %vm350, %v1489
        %s1491 = sand.u32 %s228, 1
        %s1492 = scalar_lea.sflag [#allocation4], %s1491
        %s1493 = sand.u32 %s228, 1
        %s1494 = smul.addr %s1493, 8
        %s1495 = scalar_lea.vmem [#allocation5], %s1494
        // Predicated region
        $region61: #{tpu_custom_call.1} parent=55 // pred_check
          %p1496 = pneg %p238
        $region62: #{tpu_custom_call.1} parent=55 // pred_check_branch
          %1498 = sbr.rel (%p1496) target = $region64
        $region63: #{tpu_custom_call.1} parent=55 // pred_region
          %s1500 = ssub.s32 128, 128
          %1501 = vsyncadd %s1492, %s1500
          %s1502 = smul.addr %s26, 128
          %s1503 = scalar_lea.hbm %s9, %s1502
          %s1505 = sshll.u32 %s1495, 4
          %s1506 = int_to_ptr.vmem [resolvable:$true] %s1505
          %1508 = dma.vmem_to_hbm [thread:$0]  %s1506, 128, %s1503, %s1492
        $region64: #{tpu_custom_call.1} parent=55 // pred_fallthru
          _
      $region56: #{tpu_custom_call.1} parent=5 // pred_fallthru
        _
      %p1509 = scmp.le.s32.totalorder 2, %s21
      // Predicated region
      $region65: #{tpu_custom_call.1} parent=5 // pred_check
        %p1510 = pneg %p1509
      $region66: #{tpu_custom_call.1} parent=5 // pred_check_branch
        %1512 = sbr.rel (%p1510) target = $region68
      $region67: #{tpu_custom_call.1} parent=5 // pred_region
        %s1513 = ssub.s32 %s21, 2
        // Predicated region
        $region69: #{tpu_custom_call.1} parent=67 // pred_check
          %p1514 = pneg %p244
        $region70: #{tpu_custom_call.1} parent=67 // pred_check_branch
          %1516 = sbr.rel (%p1514) target = $region72
        $region71: #{tpu_custom_call.1} parent=67 // pred_region
          %s1517 = sand.u32 %s229, 1
          %s1518 = scalar_lea.sflag [#allocation4], %s1517
          %s1519 = sand.u32 %s229, 1
          %s1520 = smul.addr %s1519, 8
          %s1521 = scalar_lea.vmem [#allocation5], %s1520
          %1522 = dma.done %s1518, 128
        $region72: #{tpu_custom_call.1} parent=67 // pred_fallthru
          _
      $region68: #{tpu_custom_call.1} parent=5 // pred_fallthru
        _
    $region6: #{tpu_custom_call.1} parent=1 // loop_footer
      %s25 = sadd.s32 1, %s21
    $region7: #{tpu_custom_call.1} parent=1 // loop_footer_branch
      %20 = sbr.rel target = $region3
    $region8: #{tpu_custom_call.1} parent=1 // loop_exit
      _
    %1523 = vsyncpa [#allocation3], 1
    %s1524 = scalar_lea.sflag [#allocation3], 1
    %1525 = vsyncpa %s1524, 1
    %1526 = vsyncpa [#allocation4], 1
    %s1527 = scalar_lea.sflag [#allocation4], 1
    %1528 = vsyncpa %s1527, 1

</llo_original>
